<compile_context>
chip_gen: v7x
topology: tpu7x:2x2x1
jax: 0.10.0
libtpu: 0.0.40
codegen_flags: <defaults>
</compile_context>

<pallas_src>
import functools
import math

import jax
import jax.numpy as jnp
from jax import lax
from jax.experimental import pallas as pl
from jax.experimental.pallas import tpu as pltpu

LN_EPS = 1e-12


# ------------------------------ kernel helpers -------------------------------
def _layernorm(x, gamma, beta):
    u = jnp.mean(x, axis=-1, keepdims=True)
    s = jnp.mean((x - u) ** 2, axis=-1, keepdims=True)
    # rsqrt goes to the EUP slot; divide+sqrt would burn VALU slots.
    return (x - u) * lax.rsqrt(s + LN_EPS) * gamma + beta


def _gelu(x):
    # exact (erf-based) GELU, matching torch ACT2FN['gelu']; tanh-approx would
    # move work to the EUP slot but changes numerics, so parity is kept.
    return x * 0.5 * (1.0 + lax.erf(x * (1.0 / math.sqrt(2.0))))


# ------------------------------- fused kernel --------------------------------
def _encoder_kernel(x_ref, lp_ref, vec_ref, w1_ref, b1_ref, w2_ref, o_ref, *,
                    num_layers, batch_tile, seq_len, inter_chunk):
    """All num_layers FREQMIXRec blocks on one resident (TB*S, H) batch block."""
    # Constants loaded once; resident across all layers (layers share identical
    # weights per copy.deepcopy-at-init).
    lp = lp_ref[...]                         # (S, S) low-pass, compute dtype
    cdt = lp.dtype                           # MXU operand dtype (bf16 or f32)
    sb = vec_ref[0:1, :]                     # sqrt_beta
    g1, be1 = vec_ref[1:2, :], vec_ref[2:3, :]
    b2 = vec_ref[3:4, :]
    g2, be2 = vec_ref[4:5, :], vec_ref[5:6, :]
    sb2 = sb * sb                            # hoisted: sqrt_beta ** 2

    m, hidden = x_ref.shape
    inter = w1_ref.shape[1]
    n_chunks = inter // inter_chunk

    x0 = x_ref[...].astype(jnp.float32)      # (TB*S, H)

    def one_layer(_, h):
        # ---- FREQMIXBlock: per-batch-row low-pass along the sequence axis ----
        hc = h.astype(cdt)
        lows = [jnp.dot(lp, hc[b * seq_len:(b + 1) * seq_len, :],
                        preferred_element_type=jnp.float32)
                for b in range(batch_tile)]
        low = lows[0] if batch_tile == 1 else jnp.concatenate(lows, axis=0)
        mixed = low + sb2 * (h - low)        # low-pass + sqrt_beta^2 * high-pass
        h1 = _layernorm(mixed + h, g1, be1)

        # ---- FeedForward: Linear -> GELU -> Linear, chunked over the 4H axis --
        h1c = h1.astype(cdt)
        y = jnp.zeros((m, hidden), jnp.float32)
        for c in range(n_chunks):
            c0 = c * inter_chunk
            t = _gelu(jnp.dot(h1c, w1_ref[:, c0:c0 + inter_chunk],
                              preferred_element_type=jnp.float32)
                      + b1_ref[:, c0:c0 + inter_chunk])
            y = y + jnp.dot(t.astype(cdt), w2_ref[c0:c0 + inter_chunk, :],
                            preferred_element_type=jnp.float32)
        return _layernorm(y + b2 + h1, g2, be2)

    out = lax.fori_loop(0, num_layers, one_layer, x0, unroll=num_layers <= 4)
    o_ref[...] = out.astype(o_ref.dtype)


# ------------------------------ tiling heuristics -----------------------------
def _physical_vmem_bytes():
    try:
        v = getattr(pltpu.get_tpu_info(), "vmem_capacity_bytes", None)
        if v:
            return int(v)
    except Exception:
        pass
    return 128 << 20   # v5e/v6e default; v7x reports 64 MiB via get_tpu_info


def _pick_inter_chunk(inter, target=1024):
    if inter <= target:
        return inter
    for c in range(target - target % 128, 0, -128):    # prefer lane multiples
        if inter % c == 0:
            return c
    for c in range(target, 0, -1):
        if inter % c == 0:
            return c
    return inter


def _plan(batch, seq_len, hidden, inter, w_bytes):
    """Pick (batch_tile, inter_chunk, vmem_limit_bytes), generation-aware."""
    phys = _physical_vmem_bytes()
    vmem_limit = int(phys * 0.5)      # explicitly above the 16/32 MiB defaults
    budget = int(phys * 0.4)          # ~40-50% of physical per core
    chunk = _pick_inter_chunk(inter)
    # Constant operands, worst case double-buffered by the pipeliner.
    const_bytes = 2 * (seq_len * seq_len * w_bytes + 2 * hidden * inter * w_bytes
                       + inter * 4 + 8 * hidden * 4)

    valid = [tb for tb in range(1, batch + 1)
             if batch % tb == 0 and (tb == batch or (tb * seq_len) % 8 == 0)]
    # Keep >= 2 grid steps so the "parallel" axis can shard over v7x's 2 TCs.
    multi = [tb for tb in valid if batch // tb >= 2] or valid

    def fits(tb):
        m = tb * seq_len
        io = 4 * m * hidden * 4                    # dbl-buffered in + out blocks
        live = m * (5 * hidden * 4 + chunk * 6)    # h/low/h1/y/out + FFN chunk
        return io + live + const_bytes <= budget

    fitting = [tb for tb in multi if fits(tb)]
    best = max(fitting) if fitting else min(multi)
    return best, chunk, vmem_limit


# ------------------------------ call wrapper ---------------------------------
def encoder_forward(x, params, lp_mat, num_layers, compute_dtype=jnp.bfloat16):
    """Run `num_layers` identical FREQMIXRec blocks fused in one pallas_call."""
    B, S, H = x.shape
    I = params["w1"].shape[1]
    w_bytes = jnp.dtype(compute_dtype).itemsize
    TB, chunk, vmem_limit = _plan(B, S, H, I, w_bytes)
    assert B % TB == 0 and I % chunk == 0
    M = TB * S

    x2d = x.reshape(B * S, H)                      # row order b*S + s (free view)
    lp = lp_mat.astype(compute_dtype)              # (S, S) MXU operand
    w1 = params["w1"].astype(compute_dtype)
    w2 = params["w2"].astype(compute_dtype)
    b1 = params["b1"].astype(jnp.float32)
    vecs = jnp.concatenate(                        # pack six (1,H) vectors -> (8,H)
        [params["sqrt_beta"], params["ln1_g"], params["ln1_b"],
         params["b2"], params["ln2_g"], params["ln2_b"],
         jnp.zeros((2, H), jnp.float32)], axis=0).astype(jnp.float32)

    flops = num_layers * (2 * B * S * S * H + 4 * B * S * H * I)
    cost = pl.CostEstimate(
        flops=int(flops),
        transcendentals=int(num_layers * B * S * I),
        bytes_accessed=int(8 * B * S * H + w_bytes * (S * S + 2 * H * I)
                           + 4 * (I + 8 * H)),
    )

    kernel = functools.partial(_encoder_kernel, num_layers=num_layers,
                               batch_tile=TB, seq_len=S, inter_chunk=chunk)
    const = lambda b: (0, 0)

    def run(single_buffer_consts):
        def cspec(shape):
            if single_buffer_consts:
                # Revisited constants: single buffer, free the VMEM for tiles.
                return pl.BlockSpec(shape, const, pipeline_mode=pl.Buffered(1))
            return pl.BlockSpec(shape, const)

        out2d = pl.pallas_call(
            kernel,
            out_shape=jax.ShapeDtypeStruct((B * S, H), x.dtype),
            grid=(B // TB,),
            in_specs=[
                pl.BlockSpec((M, H), lambda b: (b, 0)),   # activation block
                cspec((S, S)),                            # low-pass operator
                cspec((8, H)),                            # packed (1,H) vectors
                cspec((H, I)),                            # ffn w1
                cspec((1, I)),                            # ffn b1
                cspec((I, H)),                            # ffn w2
            ],
            out_specs=pl.BlockSpec((M, H), lambda b: (b, 0)),
            compiler_params=pltpu.CompilerParams(
                dimension_semantics=("parallel",),
                vmem_limit_bytes=vmem_limit),
            cost_estimate=cost,
        )(x2d, lp, vecs, w1, b1, w2)
        return out2d

    try:
        out2d = jax.block_until_ready(run(True))
    except Exception:
        # Fallback if pipeline_mode=Buffered(1) is unsupported on this jax.
        out2d = run(False)
    return out2d.reshape(B, S, H)


# ------------------------------ parameter setup ------------------------------
def build_lowpass_matrix(seq_len, cutoff):
    """(S, S) real matrix equivalent to irfft(zero_highfreq(rfft(x))) on seq axis."""
    eye = jnp.eye(seq_len, dtype=jnp.float32)
    f = jnp.fft.rfft(eye, axis=0, norm="ortho")
    mask = (jnp.arange(f.shape[0]) < cutoff)[:, None]
    lp = jnp.fft.irfft(f * mask, n=seq_len, axis=0, norm="ortho")
    return jnp.real(lp).astype(jnp.float32)


def init_block_params(key, hidden_size):
    """One FREQMIXRecBlock's params (shared across layers via copy.deepcopy)."""
    inter = 4 * hidden_size
    ks = jax.random.split(key, 3)
    return {
        "sqrt_beta": jax.random.normal(ks[0], (1, hidden_size), jnp.float32),
        "ln1_g": jnp.ones((1, hidden_size), jnp.float32),
        "ln1_b": jnp.zeros((1, hidden_size), jnp.float32),
        "w1": 0.02 * jax.random.normal(ks[1], (hidden_size, inter), jnp.float32),
        "b1": jnp.zeros((1, inter), jnp.float32),
        "w2": 0.02 * jax.random.normal(ks[2], (inter, hidden_size), jnp.float32),
        "b2": jnp.zeros((1, hidden_size), jnp.float32),
        "ln2_g": jnp.ones((1, hidden_size), jnp.float32),
        "ln2_b": jnp.zeros((1, hidden_size), jnp.float32),
    }


def freqmixrec_encoder(hidden_states, attention_mask, params, lp_mat,
                       num_hidden_layers, output_all_encoded_layers=False):
    del attention_mask  # accepted for API parity; unused by the frequency block
    all_encoder_layers = [hidden_states]
    if output_all_encoded_layers:
        h = hidden_states
        for _ in range(num_hidden_layers):
            h = encoder_forward(h, params, lp_mat, num_layers=1)
            all_encoder_layers.append(h)
        return all_encoder_layers
    final = encoder_forward(hidden_states, params, lp_mat,
                            num_layers=num_hidden_layers)
    all_encoder_layers.append(final)
    return all_encoder_layers


# ----------------------------------- main ------------------------------------
if __name__ == "__main__":
    B, S, H = 2, 8, 32
    num_hidden_layers = 2
    cutoff = 3  # number of low rFFT bins kept (args.c // 2 + 1 style)

    key = jax.random.PRNGKey(0)
    k_x, k_p = jax.random.split(key)
    hidden_states = jax.random.normal(k_x, (B, S, H), jnp.float32)
    attention_mask = jnp.zeros((B, 1, S, S), jnp.float32)  # unused

    params = init_block_params(k_p, H)
    lp_mat = build_lowpass_matrix(S, cutoff)

    outs = freqmixrec_encoder(hidden_states, attention_mask, params, lp_mat,
                              num_hidden_layers, output_all_encoded_layers=False)
    final = jax.block_until_ready(outs[-1])
    assert final.shape == (B, S, H) and len(outs) == 2
    assert bool(jnp.all(jnp.isfinite(final)))
    print("KERNEL_OK")
</pallas_src>

<mosaic_0001>
module attributes {stable_mosaic.version = 11 : i64} {
  func.func @_encoder_kernel(%arg0: i32, %arg1: memref<8x32xf32, #tpu.memory_space<vmem>>, %arg2: memref<8x8xbf16, #tpu.memory_space<vmem>>, %arg3: memref<8x32xf32, #tpu.memory_space<vmem>>, %arg4: memref<32x128xbf16, #tpu.memory_space<vmem>>, %arg5: memref<1x128xf32, #tpu.memory_space<vmem>>, %arg6: memref<128x32xbf16, #tpu.memory_space<vmem>>, %arg7: memref<8x32xf32, #tpu.memory_space<vmem>>) attributes {dimension_semantics = [#tpu.dimension_semantics<parallel>], iteration_bounds = array<i64: 2>, scalar_prefetch = 0 : i64, scratch_operands = 0 : i64, tpu.core_type = #tpu.core_type<tc>, window_params = [{transform_indices = @transform_0, window_bounds = array<i64: 8, 32>}, {pipeline_mode = #tpu.pipeline_mode<synchronous>, transform_indices = @transform_1, window_bounds = array<i64: 8, 8>}, {pipeline_mode = #tpu.pipeline_mode<synchronous>, transform_indices = @transform_2, window_bounds = array<i64: 8, 32>}, {pipeline_mode = #tpu.pipeline_mode<synchronous>, transform_indices = @transform_3, window_bounds = array<i64: 32, 128>}, {pipeline_mode = #tpu.pipeline_mode<synchronous>, transform_indices = @transform_4, window_bounds = array<i64: 1, 128>}, {pipeline_mode = #tpu.pipeline_mode<synchronous>, transform_indices = @transform_5, window_bounds = array<i64: 128, 32>}, {transform_indices = @transform_6, window_bounds = array<i64: 8, 32>}]} {
    %c0 = arith.constant 0 : index
    %c0_0 = arith.constant 0 : index
    %0 = vector.load %arg2[%c0, %c0_0] : memref<8x8xbf16, #tpu.memory_space<vmem>>, vector<8x8xbf16>
    %c0_1 = arith.constant 0 : index
    %c0_2 = arith.constant 0 : index
    %1 = vector.load %arg3[%c0_1, %c0_2] : memref<8x32xf32, #tpu.memory_space<vmem>>, vector<1x32xf32>
    %c1 = arith.constant 1 : index
    %c0_3 = arith.constant 0 : index
    %2 = vector.load %arg3[%c1, %c0_3] : memref<8x32xf32, #tpu.memory_space<vmem>>, vector<1x32xf32>
    %c2 = arith.constant 2 : index
    %c0_4 = arith.constant 0 : index
    %3 = vector.load %arg3[%c2, %c0_4] : memref<8x32xf32, #tpu.memory_space<vmem>>, vector<1x32xf32>
    %c3 = arith.constant 3 : index
    %c0_5 = arith.constant 0 : index
    %4 = vector.load %arg3[%c3, %c0_5] : memref<8x32xf32, #tpu.memory_space<vmem>>, vector<1x32xf32>
    %c4 = arith.constant 4 : index
    %c0_6 = arith.constant 0 : index
    %5 = vector.load %arg3[%c4, %c0_6] : memref<8x32xf32, #tpu.memory_space<vmem>>, vector<1x32xf32>
    %c5 = arith.constant 5 : index
    %c0_7 = arith.constant 0 : index
    %6 = vector.load %arg3[%c5, %c0_7] : memref<8x32xf32, #tpu.memory_space<vmem>>, vector<1x32xf32>
    %7 = arith.mulf %1, %1 : vector<1x32xf32>
    %c0_8 = arith.constant 0 : index
    %c0_9 = arith.constant 0 : index
    %8 = vector.load %arg1[%c0_8, %c0_9] : memref<8x32xf32, #tpu.memory_space<vmem>>, vector<8x32xf32>
    %c0_i32 = arith.constant 0 : i32
    %9 = arith.truncf %8 : vector<8x32xf32> to vector<8x32xbf16>
    %cst = arith.constant dense<0.000000e+00> : vector<8x32xf32>
    %10 = tpu.matmul %0, %9, %cst {dimension_numbers = #tpu.dot_dimension_numbers<[1], [0], [0], [1], [0, 0, 1, 1], [], []>} : vector<8x8xbf16>, vector<8x32xbf16>, vector<8x32xf32> -> vector<8x32xf32>
    %11 = arith.subf %8, %10 : vector<8x32xf32>
    %12 = vector.broadcast %7 : vector<1x32xf32> to vector<8x32xf32>
    %13 = arith.mulf %12, %11 : vector<8x32xf32>
    %14 = arith.addf %10, %13 : vector<8x32xf32>
    %15 = arith.addf %14, %8 : vector<8x32xf32>
    %cst_10 = arith.constant dense<0.000000e+00> : vector<8xf32>
    %16 = vector.multi_reduction <add>, %15, %cst_10 [1] : vector<8x32xf32> to vector<8xf32>
    %17 = vector.shape_cast %16 : vector<8xf32> to vector<8x1xf32>
    %cst_11 = arith.constant 3.200000e+01 : f32
    %18 = vector.broadcast %cst_11 : f32 to vector<8x1xf32>
    %19 = arith.divf %17, %18 : vector<8x1xf32>
    %20 = vector.broadcast %19 : vector<8x1xf32> to vector<8x32xf32>
    %21 = arith.subf %15, %20 : vector<8x32xf32>
    %22 = arith.mulf %21, %21 : vector<8x32xf32>
    %cst_12 = arith.constant dense<0.000000e+00> : vector<8xf32>
    %23 = vector.multi_reduction <add>, %22, %cst_12 [1] : vector<8x32xf32> to vector<8xf32>
    %24 = vector.shape_cast %23 : vector<8xf32> to vector<8x1xf32>
    %cst_13 = arith.constant 3.200000e+01 : f32
    %25 = vector.broadcast %cst_13 : f32 to vector<8x1xf32>
    %26 = arith.divf %24, %25 : vector<8x1xf32>
    %27 = vector.broadcast %19 : vector<8x1xf32> to vector<8x32xf32>
    %28 = arith.subf %15, %27 : vector<8x32xf32>
    %cst_14 = arith.constant 9.99999996E-13 : f32
    %29 = vector.broadcast %cst_14 : f32 to vector<8x1xf32>
    %30 = arith.addf %26, %29 : vector<8x1xf32>
    %31 = math.rsqrt %30 : vector<8x1xf32>
    %32 = vector.broadcast %31 : vector<8x1xf32> to vector<8x32xf32>
    %33 = arith.mulf %28, %32 : vector<8x32xf32>
    %34 = vector.broadcast %2 : vector<1x32xf32> to vector<8x32xf32>
    %35 = arith.mulf %33, %34 : vector<8x32xf32>
    %36 = vector.broadcast %3 : vector<1x32xf32> to vector<8x32xf32>
    %37 = arith.addf %35, %36 : vector<8x32xf32>
    %38 = arith.truncf %37 : vector<8x32xf32> to vector<8x32xbf16>
    %cst_15 = arith.constant 0.000000e+00 : f32
    %39 = vector.broadcast %cst_15 : f32 to vector<8x32xf32>
    %c0_16 = arith.constant 0 : index
    %c0_17 = arith.constant 0 : index
    %40 = vector.load %arg4[%c0_16, %c0_17] : memref<32x128xbf16, #tpu.memory_space<vmem>>, vector<32x128xbf16>
    %cst_18 = arith.constant dense<0.000000e+00> : vector<8x128xf32>
    %41 = tpu.matmul %38, %40, %cst_18 {dimension_numbers = #tpu.dot_dimension_numbers<[1], [0], [0], [1], [0, 0, 1, 1], [], []>} : vector<8x32xbf16>, vector<32x128xbf16>, vector<8x128xf32> -> vector<8x128xf32>
    %c0_19 = arith.constant 0 : index
    %c0_20 = arith.constant 0 : index
    %42 = vector.load %arg5[%c0_19, %c0_20] : memref<1x128xf32, #tpu.memory_space<vmem>>, vector<1x128xf32>
    %43 = vector.broadcast %42 : vector<1x128xf32> to vector<8x128xf32>
    %44 = arith.addf %41, %43 : vector<8x128xf32>
    %cst_21 = arith.constant 5.000000e-01 : f32
    %45 = vector.broadcast %cst_21 : f32 to vector<8x128xf32>
    %46 = arith.mulf %44, %45 : vector<8x128xf32>
    %cst_22 = arith.constant 0.707106769 : f32
    %47 = vector.broadcast %cst_22 : f32 to vector<8x128xf32>
    %48 = arith.mulf %44, %47 : vector<8x128xf32>
    %49 = math.erf %48 : vector<8x128xf32>
    %cst_23 = arith.constant 1.000000e+00 : f32
    %50 = vector.broadcast %cst_23 : f32 to vector<8x128xf32>
    %51 = arith.addf %50, %49 : vector<8x128xf32>
    %52 = arith.mulf %46, %51 : vector<8x128xf32>
    %53 = arith.truncf %52 : vector<8x128xf32> to vector<8x128xbf16>
    %c0_24 = arith.constant 0 : index
    %c0_25 = arith.constant 0 : index
    %54 = vector.load %arg6[%c0_24, %c0_25] : memref<128x32xbf16, #tpu.memory_space<vmem>>, vector<128x32xbf16>
    %cst_26 = arith.constant dense<0.000000e+00> : vector<8x32xf32>
    %55 = tpu.matmul %53, %54, %cst_26 {dimension_numbers = #tpu.dot_dimension_numbers<[1], [0], [0], [1], [0, 0, 1, 1], [], []>} : vector<8x128xbf16>, vector<128x32xbf16>, vector<8x32xf32> -> vector<8x32xf32>
    %56 = arith.addf %39, %55 : vector<8x32xf32>
    %57 = vector.broadcast %4 : vector<1x32xf32> to vector<8x32xf32>
    %58 = arith.addf %56, %57 : vector<8x32xf32>
    %59 = arith.addf %58, %37 : vector<8x32xf32>
    %cst_27 = arith.constant dense<0.000000e+00> : vector<8xf32>
    %60 = vector.multi_reduction <add>, %59, %cst_27 [1] : vector<8x32xf32> to vector<8xf32>
    %61 = vector.shape_cast %60 : vector<8xf32> to vector<8x1xf32>
    %cst_28 = arith.constant 3.200000e+01 : f32
    %62 = vector.broadcast %cst_28 : f32 to vector<8x1xf32>
    %63 = arith.divf %61, %62 : vector<8x1xf32>
    %64 = vector.broadcast %63 : vector<8x1xf32> to vector<8x32xf32>
    %65 = arith.subf %59, %64 : vector<8x32xf32>
    %66 = arith.mulf %65, %65 : vector<8x32xf32>
    %cst_29 = arith.constant dense<0.000000e+00> : vector<8xf32>
    %67 = vector.multi_reduction <add>, %66, %cst_29 [1] : vector<8x32xf32> to vector<8xf32>
    %68 = vector.shape_cast %67 : vector<8xf32> to vector<8x1xf32>
    %cst_30 = arith.constant 3.200000e+01 : f32
    %69 = vector.broadcast %cst_30 : f32 to vector<8x1xf32>
    %70 = arith.divf %68, %69 : vector<8x1xf32>
    %71 = vector.broadcast %63 : vector<8x1xf32> to vector<8x32xf32>
    %72 = arith.subf %59, %71 : vector<8x32xf32>
    %cst_31 = arith.constant 9.99999996E-13 : f32
    %73 = vector.broadcast %cst_31 : f32 to vector<8x1xf32>
    %74 = arith.addf %70, %73 : vector<8x1xf32>
    %75 = math.rsqrt %74 : vector<8x1xf32>
    %76 = vector.broadcast %75 : vector<8x1xf32> to vector<8x32xf32>
    %77 = arith.mulf %72, %76 : vector<8x32xf32>
    %78 = vector.broadcast %5 : vector<1x32xf32> to vector<8x32xf32>
    %79 = arith.mulf %77, %78 : vector<8x32xf32>
    %80 = vector.broadcast %6 : vector<1x32xf32> to vector<8x32xf32>
    %81 = arith.addf %79, %80 : vector<8x32xf32>
    %c1_i32 = arith.constant 1 : i32
    %82 = arith.truncf %81 : vector<8x32xf32> to vector<8x32xbf16>
    %cst_32 = arith.constant dense<0.000000e+00> : vector<8x32xf32>
    %83 = tpu.matmul %0, %82, %cst_32 {dimension_numbers = #tpu.dot_dimension_numbers<[1], [0], [0], [1], [0, 0, 1, 1], [], []>} : vector<8x8xbf16>, vector<8x32xbf16>, vector<8x32xf32> -> vector<8x32xf32>
    %84 = arith.subf %81, %83 : vector<8x32xf32>
    %85 = vector.broadcast %7 : vector<1x32xf32> to vector<8x32xf32>
    %86 = arith.mulf %85, %84 : vector<8x32xf32>
    %87 = arith.addf %83, %86 : vector<8x32xf32>
    %88 = arith.addf %87, %81 : vector<8x32xf32>
    %cst_33 = arith.constant dense<0.000000e+00> : vector<8xf32>
    %89 = vector.multi_reduction <add>, %88, %cst_33 [1] : vector<8x32xf32> to vector<8xf32>
    %90 = vector.shape_cast %89 : vector<8xf32> to vector<8x1xf32>
    %cst_34 = arith.constant 3.200000e+01 : f32
    %91 = vector.broadcast %cst_34 : f32 to vector<8x1xf32>
    %92 = arith.divf %90, %91 : vector<8x1xf32>
    %93 = vector.broadcast %92 : vector<8x1xf32> to vector<8x32xf32>
    %94 = arith.subf %88, %93 : vector<8x32xf32>
    %95 = arith.mulf %94, %94 : vector<8x32xf32>
    %cst_35 = arith.constant dense<0.000000e+00> : vector<8xf32>
    %96 = vector.multi_reduction <add>, %95, %cst_35 [1] : vector<8x32xf32> to vector<8xf32>
    %97 = vector.shape_cast %96 : vector<8xf32> to vector<8x1xf32>
    %cst_36 = arith.constant 3.200000e+01 : f32
    %98 = vector.broadcast %cst_36 : f32 to vector<8x1xf32>
    %99 = arith.divf %97, %98 : vector<8x1xf32>
    %100 = vector.broadcast %92 : vector<8x1xf32> to vector<8x32xf32>
    %101 = arith.subf %88, %100 : vector<8x32xf32>
    %cst_37 = arith.constant 9.99999996E-13 : f32
    %102 = vector.broadcast %cst_37 : f32 to vector<8x1xf32>
    %103 = arith.addf %99, %102 : vector<8x1xf32>
    %104 = math.rsqrt %103 : vector<8x1xf32>
    %105 = vector.broadcast %104 : vector<8x1xf32> to vector<8x32xf32>
    %106 = arith.mulf %101, %105 : vector<8x32xf32>
    %107 = vector.broadcast %2 : vector<1x32xf32> to vector<8x32xf32>
    %108 = arith.mulf %106, %107 : vector<8x32xf32>
    %109 = vector.broadcast %3 : vector<1x32xf32> to vector<8x32xf32>
    %110 = arith.addf %108, %109 : vector<8x32xf32>
    %111 = arith.truncf %110 : vector<8x32xf32> to vector<8x32xbf16>
    %cst_38 = arith.constant 0.000000e+00 : f32
    %112 = vector.broadcast %cst_38 : f32 to vector<8x32xf32>
    %c0_39 = arith.constant 0 : index
    %c0_40 = arith.constant 0 : index
    %113 = vector.load %arg4[%c0_39, %c0_40] : memref<32x128xbf16, #tpu.memory_space<vmem>>, vector<32x128xbf16>
    %cst_41 = arith.constant dense<0.000000e+00> : vector<8x128xf32>
    %114 = tpu.matmul %111, %113, %cst_41 {dimension_numbers = #tpu.dot_dimension_numbers<[1], [0], [0], [1], [0, 0, 1, 1], [], []>} : vector<8x32xbf16>, vector<32x128xbf16>, vector<8x128xf32> -> vector<8x128xf32>
    %c0_42 = arith.constant 0 : index
    %c0_43 = arith.constant 0 : index
    %115 = vector.load %arg5[%c0_42, %c0_43] : memref<1x128xf32, #tpu.memory_space<vmem>>, vector<1x128xf32>
    %116 = vector.broadcast %115 : vector<1x128xf32> to vector<8x128xf32>
    %117 = arith.addf %114, %116 : vector<8x128xf32>
    %cst_44 = arith.constant 5.000000e-01 : f32
    %118 = vector.broadcast %cst_44 : f32 to vector<8x128xf32>
    %119 = arith.mulf %117, %118 : vector<8x128xf32>
    %cst_45 = arith.constant 0.707106769 : f32
    %120 = vector.broadcast %cst_45 : f32 to vector<8x128xf32>
    %121 = arith.mulf %117, %120 : vector<8x128xf32>
    %122 = math.erf %121 : vector<8x128xf32>
    %cst_46 = arith.constant 1.000000e+00 : f32
    %123 = vector.broadcast %cst_46 : f32 to vector<8x128xf32>
    %124 = arith.addf %123, %122 : vector<8x128xf32>
    %125 = arith.mulf %119, %124 : vector<8x128xf32>
    %126 = arith.truncf %125 : vector<8x128xf32> to vector<8x128xbf16>
    %c0_47 = arith.constant 0 : index
    %c0_48 = arith.constant 0 : index
    %127 = vector.load %arg6[%c0_47, %c0_48] : memref<128x32xbf16, #tpu.memory_space<vmem>>, vector<128x32xbf16>
    %cst_49 = arith.constant dense<0.000000e+00> : vector<8x32xf32>
    %128 = tpu.matmul %126, %127, %cst_49 {dimension_numbers = #tpu.dot_dimension_numbers<[1], [0], [0], [1], [0, 0, 1, 1], [], []>} : vector<8x128xbf16>, vector<128x32xbf16>, vector<8x32xf32> -> vector<8x32xf32>
    %129 = arith.addf %112, %128 : vector<8x32xf32>
    %130 = vector.broadcast %4 : vector<1x32xf32> to vector<8x32xf32>
    %131 = arith.addf %129, %130 : vector<8x32xf32>
    %132 = arith.addf %131, %110 : vector<8x32xf32>
    %cst_50 = arith.constant dense<0.000000e+00> : vector<8xf32>
    %133 = vector.multi_reduction <add>, %132, %cst_50 [1] : vector<8x32xf32> to vector<8xf32>
    %134 = vector.shape_cast %133 : vector<8xf32> to vector<8x1xf32>
    %cst_51 = arith.constant 3.200000e+01 : f32
    %135 = vector.broadcast %cst_51 : f32 to vector<8x1xf32>
    %136 = arith.divf %134, %135 : vector<8x1xf32>
    %137 = vector.broadcast %136 : vector<8x1xf32> to vector<8x32xf32>
    %138 = arith.subf %132, %137 : vector<8x32xf32>
    %139 = arith.mulf %138, %138 : vector<8x32xf32>
    %cst_52 = arith.constant dense<0.000000e+00> : vector<8xf32>
    %140 = vector.multi_reduction <add>, %139, %cst_52 [1] : vector<8x32xf32> to vector<8xf32>
    %141 = vector.shape_cast %140 : vector<8xf32> to vector<8x1xf32>
    %cst_53 = arith.constant 3.200000e+01 : f32
    %142 = vector.broadcast %cst_53 : f32 to vector<8x1xf32>
    %143 = arith.divf %141, %142 : vector<8x1xf32>
    %144 = vector.broadcast %136 : vector<8x1xf32> to vector<8x32xf32>
    %145 = arith.subf %132, %144 : vector<8x32xf32>
    %cst_54 = arith.constant 9.99999996E-13 : f32
    %146 = vector.broadcast %cst_54 : f32 to vector<8x1xf32>
    %147 = arith.addf %143, %146 : vector<8x1xf32>
    %148 = math.rsqrt %147 : vector<8x1xf32>
    %149 = vector.broadcast %148 : vector<8x1xf32> to vector<8x32xf32>
    %150 = arith.mulf %145, %149 : vector<8x32xf32>
    %151 = vector.broadcast %5 : vector<1x32xf32> to vector<8x32xf32>
    %152 = arith.mulf %150, %151 : vector<8x32xf32>
    %153 = vector.broadcast %6 : vector<1x32xf32> to vector<8x32xf32>
    %154 = arith.addf %152, %153 : vector<8x32xf32>
    %c0_55 = arith.constant 0 : index
    %c0_56 = arith.constant 0 : index
    %155 = vector.load %arg7[%c0_55, %c0_56] : memref<8x32xf32, #tpu.memory_space<vmem>>, vector<8x32xf32>
    tpu.vector_store %arg7[%c0_55, %c0_56], %154 {strides = array<i32>} : memref<8x32xf32, #tpu.memory_space<vmem>>, vector<8x32xf32>,
    return
  }
  func.func @transform_0(%arg0: i32) -> (i32, i32) {
    %c0_i32 = arith.constant 0 : i32
    %c0_i32_0 = arith.constant 0 : i32
    return %arg0, %c0_i32 : i32, i32
  }
  func.func @transform_1(%arg0: i32) -> (i32, i32) {
    %c0_i32 = arith.constant 0 : i32
    %c0_i32_0 = arith.constant 0 : i32
    %c0_i32_1 = arith.constant 0 : i32
    return %c0_i32, %c0_i32_0 : i32, i32
  }
  func.func @transform_2(%arg0: i32) -> (i32, i32) {
    %c0_i32 = arith.constant 0 : i32
    %c0_i32_0 = arith.constant 0 : i32
    %c0_i32_1 = arith.constant 0 : i32
    return %c0_i32, %c0_i32_0 : i32, i32
  }
  func.func @transform_3(%arg0: i32) -> (i32, i32) {
    %c0_i32 = arith.constant 0 : i32
    %c0_i32_0 = arith.constant 0 : i32
    %c0_i32_1 = arith.constant 0 : i32
    return %c0_i32, %c0_i32_0 : i32, i32
  }
  func.func @transform_4(%arg0: i32) -> (i32, i32) {
    %c0_i32 = arith.constant 0 : i32
    %c0_i32_0 = arith.constant 0 : i32
    %c0_i32_1 = arith.constant 0 : i32
    return %c0_i32, %c0_i32_0 : i32, i32
  }
  func.func @transform_5(%arg0: i32) -> (i32, i32) {
    %c0_i32 = arith.constant 0 : i32
    %c0_i32_0 = arith.constant 0 : i32
    %c0_i32_1 = arith.constant 0 : i32
    return %c0_i32, %c0_i32_0 : i32, i32
  }
  func.func @transform_6(%arg0: i32) -> (i32, i32) {
    %c0_i32 = arith.constant 0 : i32
    %c0_i32_0 = arith.constant 0 : i32
    return %arg0, %c0_i32 : i32, i32
  }
}

module attributes {stable_mosaic.version = 11 : i64} {
  func.func @_encoder_kernel(%arg0: i32, %arg1: memref<8x32xf32, #tpu.memory_space<vmem>>, %arg2: memref<8x8xbf16, #tpu.memory_space<vmem>>, %arg3: memref<8x32xf32, #tpu.memory_space<vmem>>, %arg4: memref<32x128xbf16, #tpu.memory_space<vmem>>, %arg5: memref<1x128xf32, #tpu.memory_space<vmem>>, %arg6: memref<128x32xbf16, #tpu.memory_space<vmem>>, %arg7: memref<8x32xf32, #tpu.memory_space<vmem>>) attributes {dimension_semantics = [#tpu.dimension_semantics<parallel>], iteration_bounds = array<i64: 2>, scalar_prefetch = 0 : i64, scratch_operands = 0 : i64, tpu.core_type = #tpu.core_type<tc>, window_params = [{transform_indices = @transform_0, window_bounds = array<i64: 8, 32>}, {pipeline_mode = #tpu.pipeline_mode<synchronous>, transform_indices = @transform_1, window_bounds = array<i64: 8, 8>}, {pipeline_mode = #tpu.pipeline_mode<synchronous>, transform_indices = @transform_2, window_bounds = array<i64: 8, 32>}, {pipeline_mode = #tpu.pipeline_mode<synchronous>, transform_indices = @transform_3, window_bounds = array<i64: 32, 128>}, {pipeline_mode = #tpu.pipeline_mode<synchronous>, transform_indices = @transform_4, window_bounds = array<i64: 1, 128>}, {pipeline_mode = #tpu.pipeline_mode<synchronous>, transform_indices = @transform_5, window_bounds = array<i64: 128, 32>}, {transform_indices = @transform_6, window_bounds = array<i64: 8, 32>}]} {
    %c0 = arith.constant 0 : index
    %c0_0 = arith.constant 0 : index
    %0 = vector.load %arg2[%c0, %c0_0] : memref<8x8xbf16, #tpu.memory_space<vmem>>, vector<8x8xbf16>
    %c0_1 = arith.constant 0 : index
    %c0_2 = arith.constant 0 : index
    %1 = vector.load %arg3[%c0_1, %c0_2] : memref<8x32xf32, #tpu.memory_space<vmem>>, vector<1x32xf32>
    %c1 = arith.constant 1 : index
    %c0_3 = arith.constant 0 : index
    %2 = vector.load %arg3[%c1, %c0_3] : memref<8x32xf32, #tpu.memory_space<vmem>>, vector<1x32xf32>
    %c2 = arith.constant 2 : index
    %c0_4 = arith.constant 0 : index
    %3 = vector.load %arg3[%c2, %c0_4] : memref<8x32xf32, #tpu.memory_space<vmem>>, vector<1x32xf32>
    %c3 = arith.constant 3 : index
    %c0_5 = arith.constant 0 : index
    %4 = vector.load %arg3[%c3, %c0_5] : memref<8x32xf32, #tpu.memory_space<vmem>>, vector<1x32xf32>
    %c4 = arith.constant 4 : index
    %c0_6 = arith.constant 0 : index
    %5 = vector.load %arg3[%c4, %c0_6] : memref<8x32xf32, #tpu.memory_space<vmem>>, vector<1x32xf32>
    %c5 = arith.constant 5 : index
    %c0_7 = arith.constant 0 : index
    %6 = vector.load %arg3[%c5, %c0_7] : memref<8x32xf32, #tpu.memory_space<vmem>>, vector<1x32xf32>
    %7 = arith.mulf %1, %1 : vector<1x32xf32>
    %c0_8 = arith.constant 0 : index
    %c0_9 = arith.constant 0 : index
    %8 = vector.load %arg1[%c0_8, %c0_9] : memref<8x32xf32, #tpu.memory_space<vmem>>, vector<8x32xf32>
    %c0_i32 = arith.constant 0 : i32
    %9 = arith.truncf %8 : vector<8x32xf32> to vector<8x32xbf16>
    %cst = arith.constant dense<0.000000e+00> : vector<8x32xf32>
    %10 = tpu.matmul %0, %9, %cst {dimension_numbers = #tpu.dot_dimension_numbers<[1], [0], [0], [1], [0, 0, 1, 1], [], []>} : vector<8x8xbf16>, vector<8x32xbf16>, vector<8x32xf32> -> vector<8x32xf32>
    %11 = arith.subf %8, %10 : vector<8x32xf32>
    %12 = vector.broadcast %7 : vector<1x32xf32> to vector<8x32xf32>
    %13 = arith.mulf %12, %11 : vector<8x32xf32>
    %14 = arith.addf %10, %13 : vector<8x32xf32>
    %15 = arith.addf %14, %8 : vector<8x32xf32>
    %cst_10 = arith.constant dense<0.000000e+00> : vector<8xf32>
    %16 = vector.multi_reduction <add>, %15, %cst_10 [1] : vector<8x32xf32> to vector<8xf32>
    %17 = vector.shape_cast %16 : vector<8xf32> to vector<8x1xf32>
    %cst_11 = arith.constant 3.200000e+01 : f32
    %18 = vector.broadcast %cst_11 : f32 to vector<8x1xf32>
    %19 = arith.divf %17, %18 : vector<8x1xf32>
    %20 = vector.broadcast %19 : vector<8x1xf32> to vector<8x32xf32>
    %21 = arith.subf %15, %20 : vector<8x32xf32>
    %22 = arith.mulf %21, %21 : vector<8x32xf32>
    %cst_12 = arith.constant dense<0.000000e+00> : vector<8xf32>
    %23 = vector.multi_reduction <add>, %22, %cst_12 [1] : vector<8x32xf32> to vector<8xf32>
    %24 = vector.shape_cast %23 : vector<8xf32> to vector<8x1xf32>
    %cst_13 = arith.constant 3.200000e+01 : f32
    %25 = vector.broadcast %cst_13 : f32 to vector<8x1xf32>
    %26 = arith.divf %24, %25 : vector<8x1xf32>
    %27 = vector.broadcast %19 : vector<8x1xf32> to vector<8x32xf32>
    %28 = arith.subf %15, %27 : vector<8x32xf32>
    %cst_14 = arith.constant 9.99999996E-13 : f32
    %29 = vector.broadcast %cst_14 : f32 to vector<8x1xf32>
    %30 = arith.addf %26, %29 : vector<8x1xf32>
    %31 = math.rsqrt %30 : vector<8x1xf32>
    %32 = vector.broadcast %31 : vector<8x1xf32> to vector<8x32xf32>
    %33 = arith.mulf %28, %32 : vector<8x32xf32>
    %34 = vector.broadcast %2 : vector<1x32xf32> to vector<8x32xf32>
    %35 = arith.mulf %33, %34 : vector<8x32xf32>
    %36 = vector.broadcast %3 : vector<1x32xf32> to vector<8x32xf32>
    %37 = arith.addf %35, %36 : vector<8x32xf32>
    %38 = arith.truncf %37 : vector<8x32xf32> to vector<8x32xbf16>
    %cst_15 = arith.constant 0.000000e+00 : f32
    %39 = vector.broadcast %cst_15 : f32 to vector<8x32xf32>
    %c0_16 = arith.constant 0 : index
    %c0_17 = arith.constant 0 : index
    %40 = vector.load %arg4[%c0_16, %c0_17] : memref<32x128xbf16, #tpu.memory_space<vmem>>, vector<32x128xbf16>
    %cst_18 = arith.constant dense<0.000000e+00> : vector<8x128xf32>
    %41 = tpu.matmul %38, %40, %cst_18 {dimension_numbers = #tpu.dot_dimension_numbers<[1], [0], [0], [1], [0, 0, 1, 1], [], []>} : vector<8x32xbf16>, vector<32x128xbf16>, vector<8x128xf32> -> vector<8x128xf32>
    %c0_19 = arith.constant 0 : index
    %c0_20 = arith.constant 0 : index
    %42 = vector.load %arg5[%c0_19, %c0_20] : memref<1x128xf32, #tpu.memory_space<vmem>>, vector<1x128xf32>
    %43 = vector.broadcast %42 : vector<1x128xf32> to vector<8x128xf32>
    %44 = arith.addf %41, %43 : vector<8x128xf32>
    %cst_21 = arith.constant 5.000000e-01 : f32
    %45 = vector.broadcast %cst_21 : f32 to vector<8x128xf32>
    %46 = arith.mulf %44, %45 : vector<8x128xf32>
    %cst_22 = arith.constant 0.707106769 : f32
    %47 = vector.broadcast %cst_22 : f32 to vector<8x128xf32>
    %48 = arith.mulf %44, %47 : vector<8x128xf32>
    %49 = math.erf %48 : vector<8x128xf32>
    %cst_23 = arith.constant 1.000000e+00 : f32
    %50 = vector.broadcast %cst_23 : f32 to vector<8x128xf32>
    %51 = arith.addf %50, %49 : vector<8x128xf32>
    %52 = arith.mulf %46, %51 : vector<8x128xf32>
    %53 = arith.truncf %52 : vector<8x128xf32> to vector<8x128xbf16>
    %c0_24 = arith.constant 0 : index
    %c0_25 = arith.constant 0 : index
    %54 = vector.load %arg6[%c0_24, %c0_25] : memref<128x32xbf16, #tpu.memory_space<vmem>>, vector<128x32xbf16>
    %cst_26 = arith.constant dense<0.000000e+00> : vector<8x32xf32>
    %55 = tpu.matmul %53, %54, %cst_26 {dimension_numbers = #tpu.dot_dimension_numbers<[1], [0], [0], [1], [0, 0, 1, 1], [], []>} : vector<8x128xbf16>, vector<128x32xbf16>, vector<8x32xf32> -> vector<8x32xf32>
    %56 = arith.addf %39, %55 : vector<8x32xf32>
    %57 = vector.broadcast %4 : vector<1x32xf32> to vector<8x32xf32>
    %58 = arith.addf %56, %57 : vector<8x32xf32>
    %59 = arith.addf %58, %37 : vector<8x32xf32>
    %cst_27 = arith.constant dense<0.000000e+00> : vector<8xf32>
    %60 = vector.multi_reduction <add>, %59, %cst_27 [1] : vector<8x32xf32> to vector<8xf32>
    %61 = vector.shape_cast %60 : vector<8xf32> to vector<8x1xf32>
    %cst_28 = arith.constant 3.200000e+01 : f32
    %62 = vector.broadcast %cst_28 : f32 to vector<8x1xf32>
    %63 = arith.divf %61, %62 : vector<8x1xf32>
    %64 = vector.broadcast %63 : vector<8x1xf32> to vector<8x32xf32>
    %65 = arith.subf %59, %64 : vector<8x32xf32>
    %66 = arith.mulf %65, %65 : vector<8x32xf32>
    %cst_29 = arith.constant dense<0.000000e+00> : vector<8xf32>
    %67 = vector.multi_reduction <add>, %66, %cst_29 [1] : vector<8x32xf32> to vector<8xf32>
    %68 = vector.shape_cast %67 : vector<8xf32> to vector<8x1xf32>
    %cst_30 = arith.constant 3.200000e+01 : f32
    %69 = vector.broadcast %cst_30 : f32 to vector<8x1xf32>
    %70 = arith.divf %68, %69 : vector<8x1xf32>
    %71 = vector.broadcast %63 : vector<8x1xf32> to vector<8x32xf32>
    %72 = arith.subf %59, %71 : vector<8x32xf32>
    %cst_31 = arith.constant 9.99999996E-13 : f32
    %73 = vector.broadcast %cst_31 : f32 to vector<8x1xf32>
    %74 = arith.addf %70, %73 : vector<8x1xf32>
    %75 = math.rsqrt %74 : vector<8x1xf32>
    %76 = vector.broadcast %75 : vector<8x1xf32> to vector<8x32xf32>
    %77 = arith.mulf %72, %76 : vector<8x32xf32>
    %78 = vector.broadcast %5 : vector<1x32xf32> to vector<8x32xf32>
    %79 = arith.mulf %77, %78 : vector<8x32xf32>
    %80 = vector.broadcast %6 : vector<1x32xf32> to vector<8x32xf32>
    %81 = arith.addf %79, %80 : vector<8x32xf32>
    %c1_i32 = arith.constant 1 : i32
    %82 = arith.truncf %81 : vector<8x32xf32> to vector<8x32xbf16>
    %cst_32 = arith.constant dense<0.000000e+00> : vector<8x32xf32>
    %83 = tpu.matmul %0, %82, %cst_32 {dimension_numbers = #tpu.dot_dimension_numbers<[1], [0], [0], [1], [0, 0, 1, 1], [], []>} : vector<8x8xbf16>, vector<8x32xbf16>, vector<8x32xf32> -> vector<8x32xf32>
    %84 = arith.subf %81, %83 : vector<8x32xf32>
    %85 = vector.broadcast %7 : vector<1x32xf32> to vector<8x32xf32>
    %86 = arith.mulf %85, %84 : vector<8x32xf32>
    %87 = arith.addf %83, %86 : vector<8x32xf32>
    %88 = arith.addf %87, %81 : vector<8x32xf32>
    %cst_33 = arith.constant dense<0.000000e+00> : vector<8xf32>
    %89 = vector.multi_reduction <add>, %88, %cst_33 [1] : vector<8x32xf32> to vector<8xf32>
    %90 = vector.shape_cast %89 : vector<8xf32> to vector<8x1xf32>
    %cst_34 = arith.constant 3.200000e+01 : f32
    %91 = vector.broadcast %cst_34 : f32 to vector<8x1xf32>
    %92 = arith.divf %90, %91 : vector<8x1xf32>
    %93 = vector.broadcast %92 : vector<8x1xf32> to vector<8x32xf32>
    %94 = arith.subf %88, %93 : vector<8x32xf32>
    %95 = arith.mulf %94, %94 : vector<8x32xf32>
    %cst_35 = arith.constant dense<0.000000e+00> : vector<8xf32>
    %96 = vector.multi_reduction <add>, %95, %cst_35 [1] : vector<8x32xf32> to vector<8xf32>
    %97 = vector.shape_cast %96 : vector<8xf32> to vector<8x1xf32>
    %cst_36 = arith.constant 3.200000e+01 : f32
    %98 = vector.broadcast %cst_36 : f32 to vector<8x1xf32>
    %99 = arith.divf %97, %98 : vector<8x1xf32>
    %100 = vector.broadcast %92 : vector<8x1xf32> to vector<8x32xf32>
    %101 = arith.subf %88, %100 : vector<8x32xf32>
    %cst_37 = arith.constant 9.99999996E-13 : f32
    %102 = vector.broadcast %cst_37 : f32 to vector<8x1xf32>
    %103 = arith.addf %99, %102 : vector<8x1xf32>
    %104 = math.rsqrt %103 : vector<8x1xf32>
    %105 = vector.broadcast %104 : vector<8x1xf32> to vector<8x32xf32>
    %106 = arith.mulf %101, %105 : vector<8x32xf32>
    %107 = vector.broadcast %2 : vector<1x32xf32> to vector<8x32xf32>
    %108 = arith.mulf %106, %107 : vector<8x32xf32>
    %109 = vector.broadcast %3 : vector<1x32xf32> to vector<8x32xf32>
    %110 = arith.addf %108, %109 : vector<8x32xf32>
    %111 = arith.truncf %110 : vector<8x32xf32> to vector<8x32xbf16>
    %cst_38 = arith.constant 0.000000e+00 : f32
    %112 = vector.broadcast %cst_38 : f32 to vector<8x32xf32>
    %c0_39 = arith.constant 0 : index
    %c0_40 = arith.constant 0 : index
    %113 = vector.load %arg4[%c0_39, %c0_40] : memref<32x128xbf16, #tpu.memory_space<vmem>>, vector<32x128xbf16>
    %cst_41 = arith.constant dense<0.000000e+00> : vector<8x128xf32>
    %114 = tpu.matmul %111, %113, %cst_41 {dimension_numbers = #tpu.dot_dimension_numbers<[1], [0], [0], [1], [0, 0, 1, 1], [], []>} : vector<8x32xbf16>, vector<32x128xbf16>, vector<8x128xf32> -> vector<8x128xf32>
    %c0_42 = arith.constant 0 : index
    %c0_43 = arith.constant 0 : index
    %115 = vector.load %arg5[%c0_42, %c0_43] : memref<1x128xf32, #tpu.memory_space<vmem>>, vector<1x128xf32>
    %116 = vector.broadcast %115 : vector<1x128xf32> to vector<8x128xf32>
    %117 = arith.addf %114, %116 : vector<8x128xf32>
    %cst_44 = arith.constant 5.000000e-01 : f32
    %118 = vector.broadcast %cst_44 : f32 to vector<8x128xf32>
    %119 = arith.mulf %117, %118 : vector<8x128xf32>
    %cst_45 = arith.constant 0.707106769 : f32
    %120 = vector.broadcast %cst_45 : f32 to vector<8x128xf32>
    %121 = arith.mulf %117, %120 : vector<8x128xf32>
    %122 = math.erf %121 : vector<8x128xf32>
    %cst_46 = arith.constant 1.000000e+00 : f32
    %123 = vector.broadcast %cst_46 : f32 to vector<8x128xf32>
    %124 = arith.addf %123, %122 : vector<8x128xf32>
    %125 = arith.mulf %119, %124 : vector<8x128xf32>
    %126 = arith.truncf %125 : vector<8x128xf32> to vector<8x128xbf16>
    %c0_47 = arith.constant 0 : index
    %c0_48 = arith.constant 0 : index
    %127 = vector.load %arg6[%c0_47, %c0_48] : memref<128x32xbf16, #tpu.memory_space<vmem>>, vector<128x32xbf16>
    %cst_49 = arith.constant dense<0.000000e+00> : vector<8x32xf32>
    %128 = tpu.matmul %126, %127, %cst_49 {dimension_numbers = #tpu.dot_dimension_numbers<[1], [0], [0], [1], [0, 0, 1, 1], [], []>} : vector<8x128xbf16>, vector<128x32xbf16>, vector<8x32xf32> -> vector<8x32xf32>
    %129 = arith.addf %112, %128 : vector<8x32xf32>
    %130 = vector.broadcast %4 : vector<1x32xf32> to vector<8x32xf32>
    %131 = arith.addf %129, %130 : vector<8x32xf32>
    %132 = arith.addf %131, %110 : vector<8x32xf32>
    %cst_50 = arith.constant dense<0.000000e+00> : vector<8xf32>
    %133 = vector.multi_reduction <add>, %132, %cst_50 [1] : vector<8x32xf32> to vector<8xf32>
    %134 = vector.shape_cast %133 : vector<8xf32> to vector<8x1xf32>
    %cst_51 = arith.constant 3.200000e+01 : f32
    %135 = vector.broadcast %cst_51 : f32 to vector<8x1xf32>
    %136 = arith.divf %134, %135 : vector<8x1xf32>
    %137 = vector.broadcast %136 : vector<8x1xf32> to vector<8x32xf32>
    %138 = arith.subf %132, %137 : vector<8x32xf32>
    %139 = arith.mulf %138, %138 : vector<8x32xf32>
    %cst_52 = arith.constant dense<0.000000e+00> : vector<8xf32>
    %140 = vector.multi_reduction <add>, %139, %cst_52 [1] : vector<8x32xf32> to vector<8xf32>
    %141 = vector.shape_cast %140 : vector<8xf32> to vector<8x1xf32>
    %cst_53 = arith.constant 3.200000e+01 : f32
    %142 = vector.broadcast %cst_53 : f32 to vector<8x1xf32>
    %143 = arith.divf %141, %142 : vector<8x1xf32>
    %144 = vector.broadcast %136 : vector<8x1xf32> to vector<8x32xf32>
    %145 = arith.subf %132, %144 : vector<8x32xf32>
    %cst_54 = arith.constant 9.99999996E-13 : f32
    %146 = vector.broadcast %cst_54 : f32 to vector<8x1xf32>
    %147 = arith.addf %143, %146 : vector<8x1xf32>
    %148 = math.rsqrt %147 : vector<8x1xf32>
    %149 = vector.broadcast %148 : vector<8x1xf32> to vector<8x32xf32>
    %150 = arith.mulf %145, %149 : vector<8x32xf32>
    %151 = vector.broadcast %5 : vector<1x32xf32> to vector<8x32xf32>
    %152 = arith.mulf %150, %151 : vector<8x32xf32>
    %153 = vector.broadcast %6 : vector<1x32xf32> to vector<8x32xf32>
    %154 = arith.addf %152, %153 : vector<8x32xf32>
    %c0_55 = arith.constant 0 : index
    %c0_56 = arith.constant 0 : index
    %155 = vector.load %arg7[%c0_55, %c0_56] : memref<8x32xf32, #tpu.memory_space<vmem>>, vector<8x32xf32>
    tpu.vector_store %arg7[%c0_55, %c0_56], %154 {strides = array<i32>} : memref<8x32xf32, #tpu.memory_space<vmem>>, vector<8x32xf32>,
    return
  }
  func.func @transform_0(%arg0: i32) -> (i32, i32) {
    %c0_i32 = arith.constant 0 : i32
    %c0_i32_0 = arith.constant 0 : i32
    return %arg0, %c0_i32 : i32, i32
  }
  func.func @transform_1(%arg0: i32) -> (i32, i32) {
    %c0_i32 = arith.constant 0 : i32
    %c0_i32_0 = arith.constant 0 : i32
    %c0_i32_1 = arith.constant 0 : i32
    return %c0_i32, %c0_i32_0 : i32, i32
  }
  func.func @transform_2(%arg0: i32) -> (i32, i32) {
    %c0_i32 = arith.constant 0 : i32
    %c0_i32_0 = arith.constant 0 : i32
    %c0_i32_1 = arith.constant 0 : i32
    return %c0_i32, %c0_i32_0 : i32, i32
  }
  func.func @transform_3(%arg0: i32) -> (i32, i32) {
    %c0_i32 = arith.constant 0 : i32
    %c0_i32_0 = arith.constant 0 : i32
    %c0_i32_1 = arith.constant 0 : i32
    return %c0_i32, %c0_i32_0 : i32, i32
  }
  func.func @transform_4(%arg0: i32) -> (i32, i32) {
    %c0_i32 = arith.constant 0 : i32
    %c0_i32_0 = arith.constant 0 : i32
    %c0_i32_1 = arith.constant 0 : i32
    return %c0_i32, %c0_i32_0 : i32, i32
  }
  func.func @transform_5(%arg0: i32) -> (i32, i32) {
    %c0_i32 = arith.constant 0 : i32
    %c0_i32_0 = arith.constant 0 : i32
    %c0_i32_1 = arith.constant 0 : i32
    return %c0_i32, %c0_i32_0 : i32, i32
  }
  func.func @transform_6(%arg0: i32) -> (i32, i32) {
    %c0_i32 = arith.constant 0 : i32
    %c0_i32_0 = arith.constant 0 : i32
    return %arg0, %c0_i32 : i32, i32
  }
}

</mosaic_0001>

<llo_original>
// kernel: tpu_custom_call.1
$region0: #{tpu_custom_call.1}
  #allocation0 [shape = 'u32[]', space=smem, size = 0x4, offset = 0x4, fixed_abs, tag = 'smem constant byte address 0x4 - core index']
  #allocation1 [shape = 'u32[144,128]{1,0:T(1,128)}', space=vmem, size = 0x12000, scoped, tag = 'internal scratch']
  %s0 = inlined_call_operand.hbm [shape: f32[16,32], index: 0, kind: input, shape index: {}]
  %s1 = inlined_call_operand.hbm [shape: bf16[8,8], index: 1, kind: input, shape index: {}]
  %s2 = inlined_call_operand.hbm [shape: f32[8,32], index: 2, kind: input, shape index: {}]
  %s3 = inlined_call_operand.hbm [shape: bf16[32,128], index: 3, kind: input, shape index: {}]
  %s4 = inlined_call_operand.hbm [shape: f32[1,128], index: 4, kind: input, shape index: {}]
  %s5 = inlined_call_operand.hbm [shape: bf16[128,32], index: 5, kind: input, shape index: {}]
  %s6 = inlined_call_operand.hbm [shape: f32[16,32], index: 6, kind: output, shape index: {}]
  %s7 = sld [smem:[#allocation0]]
  $region81: #{tpu_custom_call.1} parent=0
    _
  %s9 = ssub.s32 1, %s7
  %s10 = scalar_select 0, %s9, %s7
  $region1: #{tpu_custom_call.1} parent=0
    #allocation2 [shape = 'u8[8192]{0}', space=vmem, size = 0x2000, scoped, tag = 'input window, operand 0']
    #allocation3 [shape = 's32[2]{0}', space=sflag, size = 0x8, scoped, tag = 'scoped memory for tpu_custom_call.1']
    #allocation4 [shape = 's32[2]{0}', space=sflag, size = 0x8, scoped, tag = 'scoped memory for tpu_custom_call.1']
    #allocation5 [shape = 'u8[2048]{0}', space=vmem, size = 0x800, scoped, tag = 'input window, operand 1, single buffered']
    #allocation6 [shape = 's32[1]{0}', space=sflag, size = 0x4, scoped, tag = 'scoped memory for tpu_custom_call.1']
    #allocation7 [shape = 'u8[4096]{0}', space=vmem, size = 0x1000, scoped, tag = 'input window, operand 2, single buffered']
    #allocation8 [shape = 'u8[8192]{0}', space=vmem, size = 0x2000, scoped, tag = 'input window, operand 3, single buffered']
    #allocation9 [shape = 's32[1]{0}', space=sflag, size = 0x4, scoped, tag = 'scoped memory for tpu_custom_call.1']
    #allocation10 [shape = 'u8[512]{0}', space=vmem, size = 0x400, scoped, tag = 'input window, operand 4, single buffered']
    #allocation11 [shape = 'u8[32768]{0}', space=vmem, size = 0x8000, scoped, tag = 'input window, operand 5, single buffered']
    #allocation12 [shape = 's32[1]{0}', space=sflag, size = 0x4, scoped, tag = 'scoped memory for tpu_custom_call.1']
    #allocation13 [shape = 'u8[8192]{0}', space=vmem, size = 0x2000, scoped, tag = 'output window, operand 0']
    %11 = vsyncpa [#allocation3], 0
    %s12 = scalar_lea.sflag [#allocation3], 1
    %13 = vsyncpa %s12, 0
    %14 = vsyncpa [#allocation6], 0
    %15 = vsyncpa [#allocation9], 0
    %16 = vsyncpa [#allocation12], 0
    %17 = vsyncpa [#allocation4], 0
    %s18 = scalar_lea.sflag [#allocation4], 1
    %19 = vsyncpa %s18, 0
    loop: start=0, step=1, limit=4
    $region2: #{tpu_custom_call.1} parent=1 // loop_pre_header
      _
    $region3: #{tpu_custom_call.1} parent=1 // loop_header
      %s21 = sphi 0, %s25
      %p22 = scmp.ge.s32.totalorder %s21, 4
      %s31 = sphi 0, %s33
      %s34 = sphi 0, %s31
      %s35 = sphi 0, %s34
      %s51 = sphi 0, %s35
      %s55 = sphi 0, %s55
      %s57 = sphi 0, %s55
      %s58 = sphi 0, %s57
      %s72 = sphi 0, %s58
      %s76 = sphi 0, %s76
      %s78 = sphi 0, %s76
      %s79 = sphi 0, %s78
      %s93 = sphi 0, %s79
      %s97 = sphi 0, %s97
      %s99 = sphi 0, %s97
      %s100 = sphi 0, %s99
      %s114 = sphi 0, %s100
      %s118 = sphi 0, %s118
      %s120 = sphi 0, %s118
      %s121 = sphi 0, %s120
      %s135 = sphi 0, %s121
      %s139 = sphi 0, %s139
      %s141 = sphi 0, %s139
      %s142 = sphi 0, %s141
      %s156 = sphi 0, %s142
      %s162 = sphi 0, %s164
      %s165 = sphi 0, %s162
      %s166 = sphi 0, %s165
      %s182 = sphi 0, %s166
    $region4: #{tpu_custom_call.1} parent=1 // loop_header_branch
      %24 = sbr.rel (%p22) target = $region8
    $region5: #{tpu_custom_call.1} parent=1 // loop_body
      %s26 = ssub.s32 %s21, 1
      %s27 = ssub.s32 %s21, 2
      %s28 = sadd.s32 %s21, 1
      %s29 = ssub.s32 %s21, %s28
      %p30 = scmp.eq.s32.totalorder %s29, 0
      %s32 = sadd.s32 %s31, 1
      %s33 = scalar_select %p30, %s31, %s32
      %p36 = pneg %p30
      %p37 = scmp.eq.s32.totalorder %s21, 1
      %p38 = por %p36, %p37
      %p39 = scmp.ne.s32.totalorder %s31, %s34
      %p40 = scmp.eq.s32.totalorder %s21, 0
      %p41 = por %p39, %p40
      %p42 = scmp.ne.s32.totalorder %s31, %s34
      %p43 = scmp.eq.s32.totalorder %s26, 1
      %p44 = por %p42, %p43
      %p45 = scmp.ne.s32.totalorder %s34, %s35
      %p46 = scmp.eq.s32.totalorder %s26, 0
      %p47 = por %p45, %p46
      %p48 = scmp.ne.s32.totalorder %s34, %s35
      %p49 = scmp.eq.s32.totalorder %s27, 1
      %p50 = por %p48, %p49
      %p52 = scmp.ne.s32.totalorder %s35, %s51
      %p53 = scmp.eq.s32.totalorder %s27, 0
      %p54 = por %p52, %p53
      %s56 = sadd.s32 %s55, 1
      %p59 = scmp.eq.s32.totalorder %s21, 1
      %p60 = scmp.ne.s32.totalorder %s55, %s57
      %p61 = scmp.eq.s32.totalorder %s21, 0
      %p62 = por %p60, %p61
      %p63 = scmp.ne.s32.totalorder %s55, %s57
      %p64 = scmp.eq.s32.totalorder %s26, 1
      %p65 = por %p63, %p64
      %p66 = scmp.ne.s32.totalorder %s57, %s58
      %p67 = scmp.eq.s32.totalorder %s26, 0
      %p68 = por %p66, %p67
      %p69 = scmp.ne.s32.totalorder %s57, %s58
      %p70 = scmp.eq.s32.totalorder %s27, 1
      %p71 = por %p69, %p70
      %p73 = scmp.ne.s32.totalorder %s58, %s72
      %p74 = scmp.eq.s32.totalorder %s27, 0
      %p75 = por %p73, %p74
      %s77 = sadd.s32 %s76, 1
      %p80 = scmp.eq.s32.totalorder %s21, 1
      %p81 = scmp.ne.s32.totalorder %s76, %s78
      %p82 = scmp.eq.s32.totalorder %s21, 0
      %p83 = por %p81, %p82
      %p84 = scmp.ne.s32.totalorder %s76, %s78
      %p85 = scmp.eq.s32.totalorder %s26, 1
      %p86 = por %p84, %p85
      %p87 = scmp.ne.s32.totalorder %s78, %s79
      %p88 = scmp.eq.s32.totalorder %s26, 0
      %p89 = por %p87, %p88
      %p90 = scmp.ne.s32.totalorder %s78, %s79
      %p91 = scmp.eq.s32.totalorder %s27, 1
      %p92 = por %p90, %p91
      %p94 = scmp.ne.s32.totalorder %s79, %s93
      %p95 = scmp.eq.s32.totalorder %s27, 0
      %p96 = por %p94, %p95
      %s98 = sadd.s32 %s97, 1
      %p101 = scmp.eq.s32.totalorder %s21, 1
      %p102 = scmp.ne.s32.totalorder %s97, %s99
      %p103 = scmp.eq.s32.totalorder %s21, 0
      %p104 = por %p102, %p103
      %p105 = scmp.ne.s32.totalorder %s97, %s99
      %p106 = scmp.eq.s32.totalorder %s26, 1
      %p107 = por %p105, %p106
      %p108 = scmp.ne.s32.totalorder %s99, %s100
      %p109 = scmp.eq.s32.totalorder %s26, 0
      %p110 = por %p108, %p109
      %p111 = scmp.ne.s32.totalorder %s99, %s100
      %p112 = scmp.eq.s32.totalorder %s27, 1
      %p113 = por %p111, %p112
      %p115 = scmp.ne.s32.totalorder %s100, %s114
      %p116 = scmp.eq.s32.totalorder %s27, 0
      %p117 = por %p115, %p116
      %s119 = sadd.s32 %s118, 1
      %p122 = scmp.eq.s32.totalorder %s21, 1
      %p123 = scmp.ne.s32.totalorder %s118, %s120
      %p124 = scmp.eq.s32.totalorder %s21, 0
      %p125 = por %p123, %p124
      %p126 = scmp.ne.s32.totalorder %s118, %s120
      %p127 = scmp.eq.s32.totalorder %s26, 1
      %p128 = por %p126, %p127
      %p129 = scmp.ne.s32.totalorder %s120, %s121
      %p130 = scmp.eq.s32.totalorder %s26, 0
      %p131 = por %p129, %p130
      %p132 = scmp.ne.s32.totalorder %s120, %s121
      %p133 = scmp.eq.s32.totalorder %s27, 1
      %p134 = por %p132, %p133
      %p136 = scmp.ne.s32.totalorder %s121, %s135
      %p137 = scmp.eq.s32.totalorder %s27, 0
      %p138 = por %p136, %p137
      %s140 = sadd.s32 %s139, 1
      %p143 = scmp.eq.s32.totalorder %s21, 1
      %p144 = scmp.ne.s32.totalorder %s139, %s141
      %p145 = scmp.eq.s32.totalorder %s21, 0
      %p146 = por %p144, %p145
      %p147 = scmp.ne.s32.totalorder %s139, %s141
      %p148 = scmp.eq.s32.totalorder %s26, 1
      %p149 = por %p147, %p148
      %p150 = scmp.ne.s32.totalorder %s141, %s142
      %p151 = scmp.eq.s32.totalorder %s26, 0
      %p152 = por %p150, %p151
      %p153 = scmp.ne.s32.totalorder %s141, %s142
      %p154 = scmp.eq.s32.totalorder %s27, 1
      %p155 = por %p153, %p154
      %p157 = scmp.ne.s32.totalorder %s142, %s156
      %p158 = scmp.eq.s32.totalorder %s27, 0
      %p159 = por %p157, %p158
      %s160 = ssub.s32 %s21, %s28
      %p161 = scmp.eq.s32.totalorder %s160, 0
      %s163 = sadd.s32 %s162, 1
      %s164 = scalar_select %p161, %s162, %s163
      %p167 = pneg %p161
      %p168 = scmp.eq.s32.totalorder %s21, 1
      %p169 = por %p167, %p168
      %p170 = scmp.ne.s32.totalorder %s162, %s165
      %p171 = scmp.eq.s32.totalorder %s21, 0
      %p172 = por %p170, %p171
      %p173 = scmp.ne.s32.totalorder %s162, %s165
      %p174 = scmp.eq.s32.totalorder %s26, 1
      %p175 = por %p173, %p174
      %p176 = scmp.ne.s32.totalorder %s165, %s166
      %p177 = scmp.eq.s32.totalorder %s26, 0
      %p178 = por %p176, %p177
      %p179 = scmp.ne.s32.totalorder %s165, %s166
      %p180 = scmp.eq.s32.totalorder %s27, 1
      %p181 = por %p179, %p180
      %p183 = scmp.ne.s32.totalorder %s166, %s182
      %p184 = scmp.eq.s32.totalorder %s27, 0
      %p185 = por %p183, %p184
      %p186 = scmp.le.s32.totalorder 1, %s21
      %p187 = scmp.lt.s32.totalorder %s21, 3
      %p188 = pnand %p186, %p187
      %p189 = pneg %p188
      // Predicated region
      $region9: #{tpu_custom_call.1} parent=5 // pred_check
        _
      $region10: #{tpu_custom_call.1} parent=5 // pred_check_branch
        %191 = sbr.rel (%p188) target = $region12
      $region11: #{tpu_custom_call.1} parent=5 // pred_region
        %s192 = ssub.s32 %s21, 1
        // Predicated region
        $region13: #{tpu_custom_call.1} parent=11 // pred_check
          %p193 = pneg %p68
        $region14: #{tpu_custom_call.1} parent=11 // pred_check_branch
          %195 = sbr.rel (%p193) target = $region16
        $region15: #{tpu_custom_call.1} parent=11 // pred_region
          %s197 = ssub.s32 64, 64
          %198 = vsyncadd [#allocation6], %s197
          %s200 = sshll.u32 [#allocation5], 4
          %s201 = int_to_ptr.vmem [resolvable:$true] %s200
          %203 = dma.hbm_to_vmem [thread:$0]  %s1, 64, %s201, [#allocation6]
        $region16: #{tpu_custom_call.1} parent=11 // pred_fallthru
          _
        // Predicated region
        $region17: #{tpu_custom_call.1} parent=11 // pred_check
          %p204 = pneg %p89
        $region18: #{tpu_custom_call.1} parent=11 // pred_check_branch
          %206 = sbr.rel (%p204) target = $region20
        $region19: #{tpu_custom_call.1} parent=11 // pred_region
          %s208 = ssub.s32 128, 128
          %209 = vsyncadd [#allocation6], %s208
          %s211 = sshll.u32 [#allocation7], 4
          %s212 = int_to_ptr.vmem [resolvable:$true] %s211
          %214 = dma.hbm_to_vmem [thread:$0]  %s2, 128, %s212, [#allocation6]
        $region20: #{tpu_custom_call.1} parent=11 // pred_fallthru
          _
        // Predicated region
        $region21: #{tpu_custom_call.1} parent=11 // pred_check
          %p215 = pneg %p110
        $region22: #{tpu_custom_call.1} parent=11 // pred_check_branch
          %217 = sbr.rel (%p215) target = $region24
        $region23: #{tpu_custom_call.1} parent=11 // pred_region
          %s219 = ssub.s32 256, 256
          %220 = vsyncadd [#allocation9], %s219
          %s221 = sshll.u32 [#allocation8], 4
          %s222 = int_to_ptr.vmem [resolvable:$true] %s221
          %227 = dma.hbm_to_vmem [thread:$0]  %s3, 256, %s222, [#allocation9], 64, 64, 4
        $region24: #{tpu_custom_call.1} parent=11 // pred_fallthru
          _
        // Predicated region
        $region25: #{tpu_custom_call.1} parent=11 // pred_check
          %p228 = pneg %p131
        $region26: #{tpu_custom_call.1} parent=11 // pred_check_branch
          %230 = sbr.rel (%p228) target = $region28
        $region27: #{tpu_custom_call.1} parent=11 // pred_region
          %s232 = ssub.s32 16, 16
          %233 = vsyncadd [#allocation9], %s232
          %s235 = sshll.u32 [#allocation10], 4
          %s236 = int_to_ptr.vmem [resolvable:$true] %s235
          %238 = dma.hbm_to_vmem [thread:$0]  %s4, 16, %s236, [#allocation9]
        $region28: #{tpu_custom_call.1} parent=11 // pred_fallthru
          _
        // Predicated region
        $region29: #{tpu_custom_call.1} parent=11 // pred_check
          %p239 = pneg %p152
        $region30: #{tpu_custom_call.1} parent=11 // pred_check_branch
          %241 = sbr.rel (%p239) target = $region32
        $region31: #{tpu_custom_call.1} parent=11 // pred_region
          %s243 = ssub.s32 1024, 1024
          %244 = vsyncadd [#allocation12], %s243
          %s245 = sshll.u32 [#allocation11], 4
          %s246 = int_to_ptr.vmem [resolvable:$true] %s245
          %251 = dma.hbm_to_vmem [thread:$0]  %s5, 1024, %s246, [#allocation12], 64, 64, 4
        $region32: #{tpu_custom_call.1} parent=11 // pred_fallthru
          _
      $region12: #{tpu_custom_call.1} parent=5 // pred_fallthru
        _
      %p252 = scmp.lt.s32.totalorder %s21, 2
      // Predicated region
      $region33: #{tpu_custom_call.1} parent=5 // pred_check
        %p253 = pneg %p252
      $region34: #{tpu_custom_call.1} parent=5 // pred_check_branch
        %255 = sbr.rel (%p253) target = $region36
      $region35: #{tpu_custom_call.1} parent=5 // pred_region
        // Predicated region
        $region37: #{tpu_custom_call.1} parent=35 // pred_check
          %p256 = pneg %p41
        $region38: #{tpu_custom_call.1} parent=35 // pred_check_branch
          %258 = sbr.rel (%p256) target = $region40
        $region39: #{tpu_custom_call.1} parent=35 // pred_region
          %s259 = sand.u32 %s31, 1
          %s260 = scalar_lea.sflag [#allocation3], %s259
          %s261 = sand.u32 %s31, 1
          %s262 = smul.addr %s261, 8
          %s263 = scalar_lea.vmem [#allocation2], %s262
          %s265 = ssub.s32 128, 128
          %266 = vsyncadd %s260, %s265
          %s267 = smul.addr %s21, 128
          %s268 = scalar_lea.hbm %s0, %s267
          %s270 = sshll.u32 %s263, 4
          %s271 = int_to_ptr.vmem [resolvable:$true] %s270
          %273 = dma.hbm_to_vmem [thread:$0]  %s268, 128, %s271, %s260
        $region40: #{tpu_custom_call.1} parent=35 // pred_fallthru
          _
      $region36: #{tpu_custom_call.1} parent=5 // pred_fallthru
        _
      %p274 = scmp.le.s32.totalorder 1, %s21
      %p275 = scmp.lt.s32.totalorder %s21, 3
      %p276 = pnand %p274, %p275
      %p277 = pneg %p276
      // Predicated region
      $region41: #{tpu_custom_call.1} parent=5 // pred_check
        _
      $region42: #{tpu_custom_call.1} parent=5 // pred_check_branch
        %279 = sbr.rel (%p276) target = $region44
      $region43: #{tpu_custom_call.1} parent=5 // pred_region
        %s280 = ssub.s32 %s21, 1
        %s281 = sand.u32 %s34, 1
        %s282 = scalar_lea.sflag [#allocation3], %s281
        %s283 = sand.u32 %s34, 1
        %s284 = smul.addr %s283, 8
        %s285 = scalar_lea.vmem [#allocation2], %s284
        // Predicated region
        $region45: #{tpu_custom_call.1} parent=43 // pred_check
          %p286 = pneg %p47
        $region46: #{tpu_custom_call.1} parent=43 // pred_check_branch
          %288 = sbr.rel (%p286) target = $region48
        $region47: #{tpu_custom_call.1} parent=43 // pred_region
          %289 = dma.done %s282, 128
        $region48: #{tpu_custom_call.1} parent=43 // pred_fallthru
          _
        // Predicated region
        $region49: #{tpu_custom_call.1} parent=43 // pred_check
          %p290 = pneg %p68
        $region50: #{tpu_custom_call.1} parent=43 // pred_check_branch
          %292 = sbr.rel (%p290) target = $region52
        $region51: #{tpu_custom_call.1} parent=43 // pred_region
          %293 = dma.done [#allocation6], 64
        $region52: #{tpu_custom_call.1} parent=43 // pred_fallthru
          _
        // Predicated region
        $region53: #{tpu_custom_call.1} parent=43 // pred_check
          %p294 = pneg %p89
        $region54: #{tpu_custom_call.1} parent=43 // pred_check_branch
          %296 = sbr.rel (%p294) target = $region56
        $region55: #{tpu_custom_call.1} parent=43 // pred_region
          %297 = dma.done [#allocation6], 128
        $region56: #{tpu_custom_call.1} parent=43 // pred_fallthru
          _
        // Predicated region
        $region57: #{tpu_custom_call.1} parent=43 // pred_check
          %p298 = pneg %p110
        $region58: #{tpu_custom_call.1} parent=43 // pred_check_branch
          %300 = sbr.rel (%p298) target = $region60
        $region59: #{tpu_custom_call.1} parent=43 // pred_region
          %301 = dma.done [#allocation9], 256
        $region60: #{tpu_custom_call.1} parent=43 // pred_fallthru
          _
        // Predicated region
        $region61: #{tpu_custom_call.1} parent=43 // pred_check
          %p302 = pneg %p131
        $region62: #{tpu_custom_call.1} parent=43 // pred_check_branch
          %304 = sbr.rel (%p302) target = $region64
        $region63: #{tpu_custom_call.1} parent=43 // pred_region
          %305 = dma.done [#allocation9], 16
        $region64: #{tpu_custom_call.1} parent=43 // pred_fallthru
          _
        // Predicated region
        $region65: #{tpu_custom_call.1} parent=43 // pred_check
          %p306 = pneg %p152
        $region66: #{tpu_custom_call.1} parent=43 // pred_check_branch
          %308 = sbr.rel (%p306) target = $region68
        $region67: #{tpu_custom_call.1} parent=43 // pred_region
          %309 = dma.done [#allocation12], 1024
        $region68: #{tpu_custom_call.1} parent=43 // pred_fallthru
          _
        %s310 = sand.u32 %s34, 1
        %s311 = scalar_lea.sflag [#allocation3], %s310
        %s312 = sand.u32 %s34, 1
        %s313 = smul.addr %s312, 8
        %s314 = scalar_lea.vmem [#allocation2], %s313
        %p315 = pneg %p47
        %p316 = pneg %p44
        %p317 = pneg %p68
        %p318 = pneg %p65
        %p319 = pneg %p89
        %p320 = pneg %p86
        %p321 = pneg %p110
        %p322 = pneg %p107
        %p323 = pneg %p131
        %p324 = pneg %p128
        %p325 = pneg %p152
        %p326 = pneg %p149
        %p327 = pneg %p178
        %p328 = pneg %p175
        %s329 = sand.u32 %s165, 1
        %s330 = scalar_lea.sflag [#allocation4], %s329
        %s331 = sand.u32 %s165, 1
        %s332 = smul.addr %s331, 8
        %s333 = scalar_lea.vmem [#allocation13], %s332
        %v335 = vld [vmem:[#allocation5] sm:$0xf]
        %v336 = vld [vmem:[#allocation7] sm:$0x1]
        %v337 = vld [vmem:[#allocation7 + $0x1] sm:$0x1]
        %v338 = vld [vmem:[#allocation7 + $0x2] sm:$0x1]
        %v339 = vld [vmem:[#allocation7 + $0x3] sm:$0x1]
        %v340 = vld [vmem:[#allocation7 + $0x4] sm:$0x1]
        %v341 = vld [vmem:[#allocation7 + $0x5] sm:$0x1]
        %v342 = vmul.f32 %v336, %v336
        %v343 = vld [vmem:[%s285] sm:$0xff]
        %v344 = vpack.c.bf16 %v343, %v343
        %vm345 = vcmask 64512
        %v347 = vsel %vm345, %v335, 0
        %vm349 = vcmask 1043456
        %v351 = vsel %vm349, %v344, 0
        %353 = vmatprep.subr.bf16.mxu0 0
        %354 = vmatpush1.bf16.msra.mxu0 %v351
        %355 = vmatprep.subr.bf16.mxu0 0
        %356 = vmatpush1.bf16.msra.mxu0 0
        %357 = vmatprep.subr.bf16.mxu0 0
        %358 = vmatpush1.bf16.msra.mxu0 0
        %359 = vmatprep.subr.bf16.mxu0 0
        %360 = vmatpush1.bf16.msra.mxu0 0
        %361 = vmatprep.subr.bf16.mxu0 0
        %362 = vmatpush1.bf16.msra.mxu0 0
        %363 = vmatprep.subr.bf16.mxu0 0
        %364 = vmatpush1.bf16.msra.mxu0 0
        %365 = vmatprep.subr.bf16.mxu0 0
        %366 = vmatpush1.bf16.msra.mxu0 0
        %367 = vmatprep.subr.bf16.mxu0 0
        %368 = vmatpush1.bf16.msra.mxu0 0
        %369 = vmatprep.subr.bf16.mxu0 0
        %370 = vmatpush1.bf16.msra.mxu0 0
        %371 = vmatprep.subr.bf16.mxu0 0
        %372 = vmatpush1.bf16.msra.mxu0 0
        %373 = vmatprep.subr.bf16.mxu0 0
        %374 = vmatpush1.bf16.msra.mxu0 0
        %375 = vmatprep.subr.bf16.mxu0 0
        %376 = vmatpush1.bf16.msra.mxu0 0
        %377 = vmatprep.subr.bf16.mxu0 0
        %378 = vmatpush1.bf16.msra.mxu0 0
        %379 = vmatprep.subr.bf16.mxu0 0
        %380 = vmatpush1.bf16.msra.mxu0 0
        %381 = vmatprep.subr.bf16.mxu0 0
        %382 = vmatpush1.bf16.msra.mxu0 0
        %383 = vmatprep.subr.bf16.mxu0 0
        %384 = vmatpush1.bf16.msra.mxu0 0
        %385 = vmatprep.mubr.bf16.mxu0 0
        %386 = vmatmul.mubr.bf16.gmra.mrb[0].mxu0 %v347
        %v387 = vpop.f32.mrb[0].mxu0
        %v388 = vadd.f32 0.0, %v387
        %v389 = vpop.f32.mrb[0].mxu0
        %v390 = vpop.f32.mrb[0].mxu0
        %v391 = vpop.f32.mrb[0].mxu0
        %392 = vdwg.mxu0
        %v393 = vsub.f32 %v343, %v388
        %v394 = vlaneseq
        %v395 = vshrl.u32 %v394, 7
        %v396 = vsub.s32 0, %v395
        %v397 = vrot.slane %v342, %v396
        %v398 = vmul.f32 %v397, %v393
        %v399 = vadd.f32 %v388, %v398
        %v400 = vadd.f32 %v399, %v343
        %vm401 = vcmask 261120
        %v402 = vsel %vm401, %v400, 0.0
        %403 = vadd.xlane.f32.xlu0 %v402
        %v404 = vpop.xlane.xlu0 %403
        %v405 = vrcp.pop 32.0
        %v406 = vmul.f32 %v404, %v405
        %v407 = vsub.f32 %v400, %v406
        %v408 = vmul.f32 %v407, %v407
        %v409 = vsel %vm401, %v408, 0.0
        %410 = vadd.xlane.f32.xlu0 %v409
        %v411 = vpop.xlane.xlu0 %410
        %v412 = vmul.f32 %v411, %v405
        %v413 = vadd.f32 %v412, 1e-12
        %v414 = vrsqrt.pop %v413
        %v415 = vmul.f32 %v407, %v414
        %v416 = vlaneseq
        %v417 = vshrl.u32 %v416, 7
        %v418 = vsub.s32 0, %v417
        %v419 = vrot.slane %v337, %v418
        %v420 = vmul.f32 %v415, %v419
        %v421 = vlaneseq
        %v422 = vshrl.u32 %v421, 7
        %v423 = vsub.s32 0, %v422
        %v424 = vrot.slane %v338, %v423
        %v425 = vadd.f32 %v420, %v424
        %v426 = vpack.c.bf16 %v425, %v425
        %v427 = vld [vmem:[#allocation8] sm:$0xf]
        %v428 = vld [vmem:[#allocation8 + $0x4] sm:$0xf]
        %v429 = vld [vmem:[#allocation8 + $0x8] sm:$0xf]
        %v430 = vld [vmem:[#allocation8 + $0xc] sm:$0xf]
        %v431 = vld [vmem:[#allocation10] sm:$0x1]
        %v433 = vlaneseq
        %v434 = vshrl.u32 %v433, 7
        %v435 = vsub.s32 0, %v434
        %v436 = vrot.slane %v431, %v435
        %v442 = vunpack.c.l.b16 %v427
        %v443 = vunpack.c.l.b16 %v428
        %v444 = vunpack.c.l.b16 %v429
        %v445 = vunpack.c.l.b16 %v430
        %v446 = vpack.c.b16 %v443, %v442
        %v447 = vpack.c.b16 %v445, %v444
        %v451 = vsel %vm401, %v426, 0
        %453 = vmatprep.subr.bf16.mxu0 0
        %454 = vmatpush1.bf16.msra.mxu0 %v446
        %455 = vmatprep.subr.bf16.mxu0 0
        %456 = vmatpush1.bf16.msra.mxu0 %v447
        %457 = vmatprep.subr.bf16.mxu0 0
        %458 = vmatpush1.bf16.msra.mxu0 0
        %459 = vmatprep.subr.bf16.mxu0 0
        %460 = vmatpush1.bf16.msra.mxu0 0
        %461 = vmatprep.subr.bf16.mxu0 0
        %462 = vmatpush1.bf16.msra.mxu0 0
        %463 = vmatprep.subr.bf16.mxu0 0
        %464 = vmatpush1.bf16.msra.mxu0 0
        %465 = vmatprep.subr.bf16.mxu0 0
        %466 = vmatpush1.bf16.msra.mxu0 0
        %467 = vmatprep.subr.bf16.mxu0 0
        %468 = vmatpush1.bf16.msra.mxu0 0
        %469 = vmatprep.subr.bf16.mxu0 0
        %470 = vmatpush1.bf16.msra.mxu0 0
        %471 = vmatprep.subr.bf16.mxu0 0
        %472 = vmatpush1.bf16.msra.mxu0 0
        %473 = vmatprep.subr.bf16.mxu0 0
        %474 = vmatpush1.bf16.msra.mxu0 0
        %475 = vmatprep.subr.bf16.mxu0 0
        %476 = vmatpush1.bf16.msra.mxu0 0
        %477 = vmatprep.subr.bf16.mxu0 0
        %478 = vmatpush1.bf16.msra.mxu0 0
        %479 = vmatprep.subr.bf16.mxu0 0
        %480 = vmatpush1.bf16.msra.mxu0 0
        %481 = vmatprep.subr.bf16.mxu0 0
        %482 = vmatpush1.bf16.msra.mxu0 0
        %483 = vmatprep.subr.bf16.mxu0 0
        %484 = vmatpush1.bf16.msra.mxu0 0
        %485 = vmatprep.mubr.bf16.mxu0 0
        %486 = vmatmul.mubr.bf16.gmra.mrb[0].mxu0 %v451
        %v487 = vpop.f32.mrb[0].mxu0
        %v488 = vadd.f32 %v436, %v487
        %v489 = vpop.f32.mrb[0].mxu0
        %v490 = vpop.f32.mrb[0].mxu0
        %v491 = vpop.f32.mrb[0].mxu0
        %492 = vdwg.mxu0
        %v493 = vmul.f32 %v488, 0.5
        %v494 = vmul.f32 %v488, 0.70710677
        %v495 = verf.f32.pop %v494
        %v496 = vadd.f32 %v495, 1.0
        %v497 = vmul.f32 %v493, %v496
        %v498 = vpack.c.bf16 %v497, %v497
        %v499 = vld [vmem:[#allocation11] sm:$0xf]
        %v500 = vld [vmem:[#allocation11 + $0x4] sm:$0xf]
        %v501 = vld [vmem:[#allocation11 + $0x8] sm:$0xf]
        %v502 = vld [vmem:[#allocation11 + $0xc] sm:$0xf]
        %v503 = vld [vmem:[#allocation11 + $0x10] sm:$0xf]
        %v504 = vld [vmem:[#allocation11 + $0x14] sm:$0xf]
        %v505 = vld [vmem:[#allocation11 + $0x18] sm:$0xf]
        %v506 = vld [vmem:[#allocation11 + $0x1c] sm:$0xf]
        %v507 = vld [vmem:[#allocation11 + $0x20] sm:$0xf]
        %v508 = vld [vmem:[#allocation11 + $0x24] sm:$0xf]
        %v509 = vld [vmem:[#allocation11 + $0x28] sm:$0xf]
        %v510 = vld [vmem:[#allocation11 + $0x2c] sm:$0xf]
        %v511 = vld [vmem:[#allocation11 + $0x30] sm:$0xf]
        %v512 = vld [vmem:[#allocation11 + $0x34] sm:$0xf]
        %v513 = vld [vmem:[#allocation11 + $0x38] sm:$0xf]
        %v514 = vld [vmem:[#allocation11 + $0x3c] sm:$0xf]
        %v515 = vlaneseq
        %v516 = vshrl.u32 %v515, 7
        %v517 = vsub.s32 0, %v516
        %v518 = vrot.slane %v339, %v517
        %v535 = vunpack.c.l.b16 %v499
        %v536 = vunpack.c.l.b16 %v500
        %v537 = vunpack.c.l.b16 %v501
        %v538 = vunpack.c.l.b16 %v502
        %v539 = vunpack.c.l.b16 %v503
        %v540 = vunpack.c.l.b16 %v504
        %v541 = vunpack.c.l.b16 %v505
        %v542 = vunpack.c.l.b16 %v506
        %v543 = vunpack.c.l.b16 %v507
        %v544 = vunpack.c.l.b16 %v508
        %v545 = vunpack.c.l.b16 %v509
        %v546 = vunpack.c.l.b16 %v510
        %v547 = vunpack.c.l.b16 %v511
        %v548 = vunpack.c.l.b16 %v512
        %v549 = vunpack.c.l.b16 %v513
        %v550 = vunpack.c.l.b16 %v514
        %v551 = vpack.c.b16 %v536, %v535
        %v552 = vpack.c.b16 %v538, %v537
        %v553 = vpack.c.b16 %v540, %v539
        %v554 = vpack.c.b16 %v542, %v541
        %v555 = vpack.c.b16 %v544, %v543
        %v556 = vpack.c.b16 %v546, %v545
        %v557 = vpack.c.b16 %v548, %v547
        %v558 = vpack.c.b16 %v550, %v549
        %567 = vmatprep.subr.bf16.mxu0 0
        %568 = vmatpush1.bf16.msra.mxu0 %v551
        %569 = vmatprep.subr.bf16.mxu0 0
        %570 = vmatpush1.bf16.msra.mxu0 %v552
        %571 = vmatprep.subr.bf16.mxu0 0
        %572 = vmatpush1.bf16.msra.mxu0 %v553
        %573 = vmatprep.subr.bf16.mxu0 0
        %574 = vmatpush1.bf16.msra.mxu0 %v554
        %575 = vmatprep.subr.bf16.mxu0 0
        %576 = vmatpush1.bf16.msra.mxu0 %v555
        %577 = vmatprep.subr.bf16.mxu0 0
        %578 = vmatpush1.bf16.msra.mxu0 %v556
        %579 = vmatprep.subr.bf16.mxu0 0
        %580 = vmatpush1.bf16.msra.mxu0 %v557
        %581 = vmatprep.subr.bf16.mxu0 0
        %582 = vmatpush1.bf16.msra.mxu0 %v558
        %583 = vmatprep.subr.bf16.mxu0 0
        %584 = vmatpush1.bf16.msra.mxu0 0
        %585 = vmatprep.subr.bf16.mxu0 0
        %586 = vmatpush1.bf16.msra.mxu0 0
        %587 = vmatprep.subr.bf16.mxu0 0
        %588 = vmatpush1.bf16.msra.mxu0 0
        %589 = vmatprep.subr.bf16.mxu0 0
        %590 = vmatpush1.bf16.msra.mxu0 0
        %591 = vmatprep.subr.bf16.mxu0 0
        %592 = vmatpush1.bf16.msra.mxu0 0
        %593 = vmatprep.subr.bf16.mxu0 0
        %594 = vmatpush1.bf16.msra.mxu0 0
        %595 = vmatprep.subr.bf16.mxu0 0
        %596 = vmatpush1.bf16.msra.mxu0 0
        %597 = vmatprep.subr.bf16.mxu0 0
        %598 = vmatpush1.bf16.msra.mxu0 0
        %599 = vmatprep.mubr.bf16.mxu0 0
        %600 = vmatmul.mubr.bf16.gmra.mrb[0].mxu0 %v498
        %v601 = vpop.f32.mrb[0].mxu0
        %v602 = vadd.f32 %v518, %v601
        %v603 = vpop.f32.mrb[0].mxu0
        %v604 = vpop.f32.mrb[0].mxu0
        %v605 = vpop.f32.mrb[0].mxu0
        %606 = vdwg.mxu0
        %v607 = vadd.f32 %v602, %v425
        %v608 = vsel %vm401, %v607, 0.0
        %609 = vadd.xlane.f32.xlu0 %v608
        %v610 = vpop.xlane.xlu0 %609
        %v611 = vmul.f32 %v610, %v405
        %v612 = vsub.f32 %v607, %v611
        %v613 = vmul.f32 %v612, %v612
        %v614 = vsel %vm401, %v613, 0.0
        %615 = vadd.xlane.f32.xlu0 %v614
        %v616 = vpop.xlane.xlu0 %615
        %v617 = vmul.f32 %v616, %v405
        %v618 = vadd.f32 %v617, 1e-12
        %v619 = vrsqrt.pop %v618
        %v620 = vmul.f32 %v612, %v619
        %v621 = vlaneseq
        %v622 = vshrl.u32 %v621, 7
        %v623 = vsub.s32 0, %v622
        %v624 = vrot.slane %v340, %v623
        %v625 = vmul.f32 %v620, %v624
        %v626 = vlaneseq
        %v627 = vshrl.u32 %v626, 7
        %v628 = vsub.s32 0, %v627
        %v629 = vrot.slane %v341, %v628
        %v630 = vadd.f32 %v625, %v629
        %v631 = vpack.c.bf16 %v630, %v630
        %v633 = vsel %vm349, %v631, 0
        %635 = vmatprep.subr.bf16.mxu0 0
        %636 = vmatpush1.bf16.msra.mxu0 %v633
        %637 = vmatprep.subr.bf16.mxu0 0
        %638 = vmatpush1.bf16.msra.mxu0 0
        %639 = vmatprep.subr.bf16.mxu0 0
        %640 = vmatpush1.bf16.msra.mxu0 0
        %641 = vmatprep.subr.bf16.mxu0 0
        %642 = vmatpush1.bf16.msra.mxu0 0
        %643 = vmatprep.subr.bf16.mxu0 0
        %644 = vmatpush1.bf16.msra.mxu0 0
        %645 = vmatprep.subr.bf16.mxu0 0
        %646 = vmatpush1.bf16.msra.mxu0 0
        %647 = vmatprep.subr.bf16.mxu0 0
        %648 = vmatpush1.bf16.msra.mxu0 0
        %649 = vmatprep.subr.bf16.mxu0 0
        %650 = vmatpush1.bf16.msra.mxu0 0
        %651 = vmatprep.subr.bf16.mxu0 0
        %652 = vmatpush1.bf16.msra.mxu0 0
        %653 = vmatprep.subr.bf16.mxu0 0
        %654 = vmatpush1.bf16.msra.mxu0 0
        %655 = vmatprep.subr.bf16.mxu0 0
        %656 = vmatpush1.bf16.msra.mxu0 0
        %657 = vmatprep.subr.bf16.mxu0 0
        %658 = vmatpush1.bf16.msra.mxu0 0
        %659 = vmatprep.subr.bf16.mxu0 0
        %660 = vmatpush1.bf16.msra.mxu0 0
        %661 = vmatprep.subr.bf16.mxu0 0
        %662 = vmatpush1.bf16.msra.mxu0 0
        %663 = vmatprep.subr.bf16.mxu0 0
        %664 = vmatpush1.bf16.msra.mxu0 0
        %665 = vmatprep.subr.bf16.mxu0 0
        %666 = vmatpush1.bf16.msra.mxu0 0
        %667 = vmatprep.mubr.bf16.mxu0 0
        %668 = vmatmul.mubr.bf16.gmra.mrb[0].mxu0 %v347
        %v669 = vpop.f32.mrb[0].mxu0
        %v670 = vadd.f32 0.0, %v669
        %v671 = vpop.f32.mrb[0].mxu0
        %v672 = vpop.f32.mrb[0].mxu0
        %v673 = vpop.f32.mrb[0].mxu0
        %674 = vdwg.mxu0
        %v675 = vsub.f32 %v630, %v670
        %v676 = vmul.f32 %v397, %v675
        %v677 = vadd.f32 %v670, %v676
        %v678 = vadd.f32 %v677, %v630
        %v679 = vsel %vm401, %v678, 0.0
        %680 = vadd.xlane.f32.xlu0 %v679
        %v681 = vpop.xlane.xlu0 %680
        %v682 = vmul.f32 %v681, %v405
        %v683 = vsub.f32 %v678, %v682
        %v684 = vmul.f32 %v683, %v683
        %v685 = vsel %vm401, %v684, 0.0
        %686 = vadd.xlane.f32.xlu0 %v685
        %v687 = vpop.xlane.xlu0 %686
        %v688 = vmul.f32 %v687, %v405
        %v689 = vadd.f32 %v688, 1e-12
        %v690 = vrsqrt.pop %v689
        %v691 = vmul.f32 %v683, %v690
        %v692 = vmul.f32 %v691, %v419
        %v693 = vadd.f32 %v692, %v424
        %v694 = vpack.c.bf16 %v693, %v693
        %v696 = vsel %vm401, %v694, 0
        %698 = vmatprep.subr.bf16.mxu0 0
        %699 = vmatpush1.bf16.msra.mxu0 %v446
        %700 = vmatprep.subr.bf16.mxu0 0
        %701 = vmatpush1.bf16.msra.mxu0 %v447
        %702 = vmatprep.subr.bf16.mxu0 0
        %703 = vmatpush1.bf16.msra.mxu0 0
        %704 = vmatprep.subr.bf16.mxu0 0
        %705 = vmatpush1.bf16.msra.mxu0 0
        %706 = vmatprep.subr.bf16.mxu0 0
        %707 = vmatpush1.bf16.msra.mxu0 0
        %708 = vmatprep.subr.bf16.mxu0 0
        %709 = vmatpush1.bf16.msra.mxu0 0
        %710 = vmatprep.subr.bf16.mxu0 0
        %711 = vmatpush1.bf16.msra.mxu0 0
        %712 = vmatprep.subr.bf16.mxu0 0
        %713 = vmatpush1.bf16.msra.mxu0 0
        %714 = vmatprep.subr.bf16.mxu0 0
        %715 = vmatpush1.bf16.msra.mxu0 0
        %716 = vmatprep.subr.bf16.mxu0 0
        %717 = vmatpush1.bf16.msra.mxu0 0
        %718 = vmatprep.subr.bf16.mxu0 0
        %719 = vmatpush1.bf16.msra.mxu0 0
        %720 = vmatprep.subr.bf16.mxu0 0
        %721 = vmatpush1.bf16.msra.mxu0 0
        %722 = vmatprep.subr.bf16.mxu0 0
        %723 = vmatpush1.bf16.msra.mxu0 0
        %724 = vmatprep.subr.bf16.mxu0 0
        %725 = vmatpush1.bf16.msra.mxu0 0
        %726 = vmatprep.subr.bf16.mxu0 0
        %727 = vmatpush1.bf16.msra.mxu0 0
        %728 = vmatprep.subr.bf16.mxu0 0
        %729 = vmatpush1.bf16.msra.mxu0 0
        %730 = vmatprep.mubr.bf16.mxu0 0
        %731 = vmatmul.mubr.bf16.gmra.mrb[0].mxu0 %v696
        %v732 = vpop.f32.mrb[0].mxu0
        %v733 = vadd.f32 %v436, %v732
        %v734 = vpop.f32.mrb[0].mxu0
        %v735 = vpop.f32.mrb[0].mxu0
        %v736 = vpop.f32.mrb[0].mxu0
        %737 = vdwg.mxu0
        %v738 = vmul.f32 %v733, 0.5
        %v739 = vmul.f32 %v733, 0.70710677
        %v740 = verf.f32.pop %v739
        %v741 = vadd.f32 %v740, 1.0
        %v742 = vmul.f32 %v738, %v741
        %v743 = vpack.c.bf16 %v742, %v742
        %744 = vmatprep.subr.bf16.mxu0 0
        %745 = vmatpush1.bf16.msra.mxu0 %v551
        %746 = vmatprep.subr.bf16.mxu0 0
        %747 = vmatpush1.bf16.msra.mxu0 %v552
        %748 = vmatprep.subr.bf16.mxu0 0
        %749 = vmatpush1.bf16.msra.mxu0 %v553
        %750 = vmatprep.subr.bf16.mxu0 0
        %751 = vmatpush1.bf16.msra.mxu0 %v554
        %752 = vmatprep.subr.bf16.mxu0 0
        %753 = vmatpush1.bf16.msra.mxu0 %v555
        %754 = vmatprep.subr.bf16.mxu0 0
        %755 = vmatpush1.bf16.msra.mxu0 %v556
        %756 = vmatprep.subr.bf16.mxu0 0
        %757 = vmatpush1.bf16.msra.mxu0 %v557
        %758 = vmatprep.subr.bf16.mxu0 0
        %759 = vmatpush1.bf16.msra.mxu0 %v558
        %760 = vmatprep.subr.bf16.mxu0 0
        %761 = vmatpush1.bf16.msra.mxu0 0
        %762 = vmatprep.subr.bf16.mxu0 0
        %763 = vmatpush1.bf16.msra.mxu0 0
        %764 = vmatprep.subr.bf16.mxu0 0
        %765 = vmatpush1.bf16.msra.mxu0 0
        %766 = vmatprep.subr.bf16.mxu0 0
        %767 = vmatpush1.bf16.msra.mxu0 0
        %768 = vmatprep.subr.bf16.mxu0 0
        %769 = vmatpush1.bf16.msra.mxu0 0
        %770 = vmatprep.subr.bf16.mxu0 0
        %771 = vmatpush1.bf16.msra.mxu0 0
        %772 = vmatprep.subr.bf16.mxu0 0
        %773 = vmatpush1.bf16.msra.mxu0 0
        %774 = vmatprep.subr.bf16.mxu0 0
        %775 = vmatpush1.bf16.msra.mxu0 0
        %776 = vmatprep.mubr.bf16.mxu0 0
        %777 = vmatmul.mubr.bf16.gmra.mrb[0].mxu0 %v743
        %v778 = vpop.f32.mrb[0].mxu0
        %v779 = vadd.f32 %v518, %v778
        %v780 = vpop.f32.mrb[0].mxu0
        %v781 = vpop.f32.mrb[0].mxu0
        %v782 = vpop.f32.mrb[0].mxu0
        %783 = vdwg.mxu0
        %v784 = vadd.f32 %v779, %v693
        %v785 = vsel %vm401, %v784, 0.0
        %786 = vadd.xlane.f32.xlu0 %v785
        %v787 = vpop.xlane.xlu0 %786
        %v788 = vmul.f32 %v787, %v405
        %v789 = vsub.f32 %v784, %v788
        %v790 = vmul.f32 %v789, %v789
        %v791 = vsel %vm401, %v790, 0.0
        %792 = vadd.xlane.f32.xlu0 %v791
        %v793 = vpop.xlane.xlu0 %792
        %v794 = vmul.f32 %v793, %v405
        %v795 = vadd.f32 %v794, 1e-12
        %v796 = vrsqrt.pop %v795
        %v797 = vmul.f32 %v789, %v796
        %v798 = vmul.f32 %v797, %v624
        %v799 = vadd.f32 %v798, %v629
        %800 = vst.msk [vmem:[%s333] sm:$0xff] %vm401, %v799
        %s801 = sand.u32 %s165, 1
        %s802 = scalar_lea.sflag [#allocation4], %s801
        %s803 = sand.u32 %s165, 1
        %s804 = smul.addr %s803, 8
        %s805 = scalar_lea.vmem [#allocation13], %s804
        // Predicated region
        $region69: #{tpu_custom_call.1} parent=43 // pred_check
          %p806 = pneg %p175
        $region70: #{tpu_custom_call.1} parent=43 // pred_check_branch
          %808 = sbr.rel (%p806) target = $region72
        $region71: #{tpu_custom_call.1} parent=43 // pred_region
          %s810 = ssub.s32 128, 128
          %811 = vsyncadd %s802, %s810
          %s812 = smul.addr %s26, 128
          %s813 = scalar_lea.hbm %s6, %s812
          %s815 = sshll.u32 %s805, 4
          %s816 = int_to_ptr.vmem [resolvable:$true] %s815
          %818 = dma.vmem_to_hbm [thread:$0]  %s816, 128, %s813, %s802
        $region72: #{tpu_custom_call.1} parent=43 // pred_fallthru
          _
      $region44: #{tpu_custom_call.1} parent=5 // pred_fallthru
        _
      %p819 = scmp.le.s32.totalorder 2, %s21
      // Predicated region
      $region73: #{tpu_custom_call.1} parent=5 // pred_check
        %p820 = pneg %p819
      $region74: #{tpu_custom_call.1} parent=5 // pred_check_branch
        %822 = sbr.rel (%p820) target = $region76
      $region75: #{tpu_custom_call.1} parent=5 // pred_region
        %s823 = ssub.s32 %s21, 2
        // Predicated region
        $region77: #{tpu_custom_call.1} parent=75 // pred_check
          %p824 = pneg %p181
        $region78: #{tpu_custom_call.1} parent=75 // pred_check_branch
          %826 = sbr.rel (%p824) target = $region80
        $region79: #{tpu_custom_call.1} parent=75 // pred_region
          %s827 = sand.u32 %s166, 1
          %s828 = scalar_lea.sflag [#allocation4], %s827
          %s829 = sand.u32 %s166, 1
          %s830 = smul.addr %s829, 8
          %s831 = scalar_lea.vmem [#allocation13], %s830
          %832 = dma.done %s828, 128
        $region80: #{tpu_custom_call.1} parent=75 // pred_fallthru
          _
      $region76: #{tpu_custom_call.1} parent=5 // pred_fallthru
        _
    $region6: #{tpu_custom_call.1} parent=1 // loop_footer
      %s25 = sadd.s32 1, %s21
    $region7: #{tpu_custom_call.1} parent=1 // loop_footer_branch
      %20 = sbr.rel target = $region3
    $region8: #{tpu_custom_call.1} parent=1 // loop_exit
      _
    %833 = vsyncpa [#allocation3], 1
    %s834 = scalar_lea.sflag [#allocation3], 1
    %835 = vsyncpa %s834, 1
    %836 = vsyncpa [#allocation6], 1
    %837 = vsyncpa [#allocation9], 1
    %838 = vsyncpa [#allocation12], 1
    %839 = vsyncpa [#allocation4], 1
    %s840 = scalar_lea.sflag [#allocation4], 1
    %841 = vsyncpa %s840, 1

// kernel: tpu_custom_call.1
$region0: #{tpu_custom_call.1}
  #allocation0 [shape = 'u32[]', space=smem, size = 0x4, offset = 0x4, fixed_abs, tag = 'smem constant byte address 0x4 - core index']
  #allocation1 [shape = 'u32[144,128]{1,0:T(1,128)}', space=vmem, size = 0x12000, scoped, tag = 'internal scratch']
  %s0 = inlined_call_operand.hbm [shape: f32[16,32], index: 0, kind: input, shape index: {}]
  %s1 = inlined_call_operand.hbm [shape: bf16[8,8], index: 1, kind: input, shape index: {}]
  %s2 = inlined_call_operand.hbm [shape: f32[8,32], index: 2, kind: input, shape index: {}]
  %s3 = inlined_call_operand.hbm [shape: bf16[32,128], index: 3, kind: input, shape index: {}]
  %s4 = inlined_call_operand.hbm [shape: f32[1,128], index: 4, kind: input, shape index: {}]
  %s5 = inlined_call_operand.hbm [shape: bf16[128,32], index: 5, kind: input, shape index: {}]
  %s6 = inlined_call_operand.hbm [shape: f32[16,32], index: 6, kind: output, shape index: {}]
  %s7 = sld [smem:[#allocation0]]
  $region81: #{tpu_custom_call.1} parent=0
    _
  %s9 = ssub.s32 1, %s7
  %s10 = scalar_select 0, %s9, %s7
  $region1: #{tpu_custom_call.1} parent=0
    #allocation2 [shape = 'u8[8192]{0}', space=vmem, size = 0x2000, scoped, tag = 'input window, operand 0']
    #allocation3 [shape = 's32[2]{0}', space=sflag, size = 0x8, scoped, tag = 'scoped memory for tpu_custom_call.1']
    #allocation4 [shape = 's32[2]{0}', space=sflag, size = 0x8, scoped, tag = 'scoped memory for tpu_custom_call.1']
    #allocation5 [shape = 'u8[2048]{0}', space=vmem, size = 0x800, scoped, tag = 'input window, operand 1, single buffered']
    #allocation6 [shape = 's32[1]{0}', space=sflag, size = 0x4, scoped, tag = 'scoped memory for tpu_custom_call.1']
    #allocation7 [shape = 'u8[4096]{0}', space=vmem, size = 0x1000, scoped, tag = 'input window, operand 2, single buffered']
    #allocation8 [shape = 'u8[8192]{0}', space=vmem, size = 0x2000, scoped, tag = 'input window, operand 3, single buffered']
    #allocation9 [shape = 's32[1]{0}', space=sflag, size = 0x4, scoped, tag = 'scoped memory for tpu_custom_call.1']
    #allocation10 [shape = 'u8[512]{0}', space=vmem, size = 0x400, scoped, tag = 'input window, operand 4, single buffered']
    #allocation11 [shape = 'u8[32768]{0}', space=vmem, size = 0x8000, scoped, tag = 'input window, operand 5, single buffered']
    #allocation12 [shape = 's32[1]{0}', space=sflag, size = 0x4, scoped, tag = 'scoped memory for tpu_custom_call.1']
    #allocation13 [shape = 'u8[8192]{0}', space=vmem, size = 0x2000, scoped, tag = 'output window, operand 0']
    %11 = vsyncpa [#allocation3], 0
    %s12 = scalar_lea.sflag [#allocation3], 1
    %13 = vsyncpa %s12, 0
    %14 = vsyncpa [#allocation6], 0
    %15 = vsyncpa [#allocation9], 0
    %16 = vsyncpa [#allocation12], 0
    %17 = vsyncpa [#allocation4], 0
    %s18 = scalar_lea.sflag [#allocation4], 1
    %19 = vsyncpa %s18, 0
    loop: start=0, step=1, limit=4
    $region2: #{tpu_custom_call.1} parent=1 // loop_pre_header
      _
    $region3: #{tpu_custom_call.1} parent=1 // loop_header
      %s21 = sphi 0, %s25
      %p22 = scmp.ge.s32.totalorder %s21, 4
      %s31 = sphi 0, %s33
      %s34 = sphi 0, %s31
      %s35 = sphi 0, %s34
      %s51 = sphi 0, %s35
      %s55 = sphi 0, %s55
      %s57 = sphi 0, %s55
      %s58 = sphi 0, %s57
      %s72 = sphi 0, %s58
      %s76 = sphi 0, %s76
      %s78 = sphi 0, %s76
      %s79 = sphi 0, %s78
      %s93 = sphi 0, %s79
      %s97 = sphi 0, %s97
      %s99 = sphi 0, %s97
      %s100 = sphi 0, %s99
      %s114 = sphi 0, %s100
      %s118 = sphi 0, %s118
      %s120 = sphi 0, %s118
      %s121 = sphi 0, %s120
      %s135 = sphi 0, %s121
      %s139 = sphi 0, %s139
      %s141 = sphi 0, %s139
      %s142 = sphi 0, %s141
      %s156 = sphi 0, %s142
      %s162 = sphi 0, %s164
      %s165 = sphi 0, %s162
      %s166 = sphi 0, %s165
      %s182 = sphi 0, %s166
    $region4: #{tpu_custom_call.1} parent=1 // loop_header_branch
      %24 = sbr.rel (%p22) target = $region8
    $region5: #{tpu_custom_call.1} parent=1 // loop_body
      %s26 = ssub.s32 %s21, 1
      %s27 = ssub.s32 %s21, 2
      %s28 = sadd.s32 %s21, 1
      %s29 = ssub.s32 %s21, %s28
      %p30 = scmp.eq.s32.totalorder %s29, 0
      %s32 = sadd.s32 %s31, 1
      %s33 = scalar_select %p30, %s31, %s32
      %p36 = pneg %p30
      %p37 = scmp.eq.s32.totalorder %s21, 1
      %p38 = por %p36, %p37
      %p39 = scmp.ne.s32.totalorder %s31, %s34
      %p40 = scmp.eq.s32.totalorder %s21, 0
      %p41 = por %p39, %p40
      %p42 = scmp.ne.s32.totalorder %s31, %s34
      %p43 = scmp.eq.s32.totalorder %s26, 1
      %p44 = por %p42, %p43
      %p45 = scmp.ne.s32.totalorder %s34, %s35
      %p46 = scmp.eq.s32.totalorder %s26, 0
      %p47 = por %p45, %p46
      %p48 = scmp.ne.s32.totalorder %s34, %s35
      %p49 = scmp.eq.s32.totalorder %s27, 1
      %p50 = por %p48, %p49
      %p52 = scmp.ne.s32.totalorder %s35, %s51
      %p53 = scmp.eq.s32.totalorder %s27, 0
      %p54 = por %p52, %p53
      %s56 = sadd.s32 %s55, 1
      %p59 = scmp.eq.s32.totalorder %s21, 1
      %p60 = scmp.ne.s32.totalorder %s55, %s57
      %p61 = scmp.eq.s32.totalorder %s21, 0
      %p62 = por %p60, %p61
      %p63 = scmp.ne.s32.totalorder %s55, %s57
      %p64 = scmp.eq.s32.totalorder %s26, 1
      %p65 = por %p63, %p64
      %p66 = scmp.ne.s32.totalorder %s57, %s58
      %p67 = scmp.eq.s32.totalorder %s26, 0
      %p68 = por %p66, %p67
      %p69 = scmp.ne.s32.totalorder %s57, %s58
      %p70 = scmp.eq.s32.totalorder %s27, 1
      %p71 = por %p69, %p70
      %p73 = scmp.ne.s32.totalorder %s58, %s72
      %p74 = scmp.eq.s32.totalorder %s27, 0
      %p75 = por %p73, %p74
      %s77 = sadd.s32 %s76, 1
      %p80 = scmp.eq.s32.totalorder %s21, 1
      %p81 = scmp.ne.s32.totalorder %s76, %s78
      %p82 = scmp.eq.s32.totalorder %s21, 0
      %p83 = por %p81, %p82
      %p84 = scmp.ne.s32.totalorder %s76, %s78
      %p85 = scmp.eq.s32.totalorder %s26, 1
      %p86 = por %p84, %p85
      %p87 = scmp.ne.s32.totalorder %s78, %s79
      %p88 = scmp.eq.s32.totalorder %s26, 0
      %p89 = por %p87, %p88
      %p90 = scmp.ne.s32.totalorder %s78, %s79
      %p91 = scmp.eq.s32.totalorder %s27, 1
      %p92 = por %p90, %p91
      %p94 = scmp.ne.s32.totalorder %s79, %s93
      %p95 = scmp.eq.s32.totalorder %s27, 0
      %p96 = por %p94, %p95
      %s98 = sadd.s32 %s97, 1
      %p101 = scmp.eq.s32.totalorder %s21, 1
      %p102 = scmp.ne.s32.totalorder %s97, %s99
      %p103 = scmp.eq.s32.totalorder %s21, 0
      %p104 = por %p102, %p103
      %p105 = scmp.ne.s32.totalorder %s97, %s99
      %p106 = scmp.eq.s32.totalorder %s26, 1
      %p107 = por %p105, %p106
      %p108 = scmp.ne.s32.totalorder %s99, %s100
      %p109 = scmp.eq.s32.totalorder %s26, 0
      %p110 = por %p108, %p109
      %p111 = scmp.ne.s32.totalorder %s99, %s100
      %p112 = scmp.eq.s32.totalorder %s27, 1
      %p113 = por %p111, %p112
      %p115 = scmp.ne.s32.totalorder %s100, %s114
      %p116 = scmp.eq.s32.totalorder %s27, 0
      %p117 = por %p115, %p116
      %s119 = sadd.s32 %s118, 1
      %p122 = scmp.eq.s32.totalorder %s21, 1
      %p123 = scmp.ne.s32.totalorder %s118, %s120
      %p124 = scmp.eq.s32.totalorder %s21, 0
      %p125 = por %p123, %p124
      %p126 = scmp.ne.s32.totalorder %s118, %s120
      %p127 = scmp.eq.s32.totalorder %s26, 1
      %p128 = por %p126, %p127
      %p129 = scmp.ne.s32.totalorder %s120, %s121
      %p130 = scmp.eq.s32.totalorder %s26, 0
      %p131 = por %p129, %p130
      %p132 = scmp.ne.s32.totalorder %s120, %s121
      %p133 = scmp.eq.s32.totalorder %s27, 1
      %p134 = por %p132, %p133
      %p136 = scmp.ne.s32.totalorder %s121, %s135
      %p137 = scmp.eq.s32.totalorder %s27, 0
      %p138 = por %p136, %p137
      %s140 = sadd.s32 %s139, 1
      %p143 = scmp.eq.s32.totalorder %s21, 1
      %p144 = scmp.ne.s32.totalorder %s139, %s141
      %p145 = scmp.eq.s32.totalorder %s21, 0
      %p146 = por %p144, %p145
      %p147 = scmp.ne.s32.totalorder %s139, %s141
      %p148 = scmp.eq.s32.totalorder %s26, 1
      %p149 = por %p147, %p148
      %p150 = scmp.ne.s32.totalorder %s141, %s142
      %p151 = scmp.eq.s32.totalorder %s26, 0
      %p152 = por %p150, %p151
      %p153 = scmp.ne.s32.totalorder %s141, %s142
      %p154 = scmp.eq.s32.totalorder %s27, 1
      %p155 = por %p153, %p154
      %p157 = scmp.ne.s32.totalorder %s142, %s156
      %p158 = scmp.eq.s32.totalorder %s27, 0
      %p159 = por %p157, %p158
      %s160 = ssub.s32 %s21, %s28
      %p161 = scmp.eq.s32.totalorder %s160, 0
      %s163 = sadd.s32 %s162, 1
      %s164 = scalar_select %p161, %s162, %s163
      %p167 = pneg %p161
      %p168 = scmp.eq.s32.totalorder %s21, 1
      %p169 = por %p167, %p168
      %p170 = scmp.ne.s32.totalorder %s162, %s165
      %p171 = scmp.eq.s32.totalorder %s21, 0
      %p172 = por %p170, %p171
      %p173 = scmp.ne.s32.totalorder %s162, %s165
      %p174 = scmp.eq.s32.totalorder %s26, 1
      %p175 = por %p173, %p174
      %p176 = scmp.ne.s32.totalorder %s165, %s166
      %p177 = scmp.eq.s32.totalorder %s26, 0
      %p178 = por %p176, %p177
      %p179 = scmp.ne.s32.totalorder %s165, %s166
      %p180 = scmp.eq.s32.totalorder %s27, 1
      %p181 = por %p179, %p180
      %p183 = scmp.ne.s32.totalorder %s166, %s182
      %p184 = scmp.eq.s32.totalorder %s27, 0
      %p185 = por %p183, %p184
      %p186 = scmp.le.s32.totalorder 1, %s21
      %p187 = scmp.lt.s32.totalorder %s21, 3
      %p188 = pnand %p186, %p187
      %p189 = pneg %p188
      // Predicated region
      $region9: #{tpu_custom_call.1} parent=5 // pred_check
        _
      $region10: #{tpu_custom_call.1} parent=5 // pred_check_branch
        %191 = sbr.rel (%p188) target = $region12
      $region11: #{tpu_custom_call.1} parent=5 // pred_region
        %s192 = ssub.s32 %s21, 1
        // Predicated region
        $region13: #{tpu_custom_call.1} parent=11 // pred_check
          %p193 = pneg %p68
        $region14: #{tpu_custom_call.1} parent=11 // pred_check_branch
          %195 = sbr.rel (%p193) target = $region16
        $region15: #{tpu_custom_call.1} parent=11 // pred_region
          %s197 = ssub.s32 64, 64
          %198 = vsyncadd [#allocation6], %s197
          %s200 = sshll.u32 [#allocation5], 4
          %s201 = int_to_ptr.vmem [resolvable:$true] %s200
          %203 = dma.hbm_to_vmem [thread:$0]  %s1, 64, %s201, [#allocation6]
        $region16: #{tpu_custom_call.1} parent=11 // pred_fallthru
          _
        // Predicated region
        $region17: #{tpu_custom_call.1} parent=11 // pred_check
          %p204 = pneg %p89
        $region18: #{tpu_custom_call.1} parent=11 // pred_check_branch
          %206 = sbr.rel (%p204) target = $region20
        $region19: #{tpu_custom_call.1} parent=11 // pred_region
          %s208 = ssub.s32 128, 128
          %209 = vsyncadd [#allocation6], %s208
          %s211 = sshll.u32 [#allocation7], 4
          %s212 = int_to_ptr.vmem [resolvable:$true] %s211
          %214 = dma.hbm_to_vmem [thread:$0]  %s2, 128, %s212, [#allocation6]
        $region20: #{tpu_custom_call.1} parent=11 // pred_fallthru
          _
        // Predicated region
        $region21: #{tpu_custom_call.1} parent=11 // pred_check
          %p215 = pneg %p110
        $region22: #{tpu_custom_call.1} parent=11 // pred_check_branch
          %217 = sbr.rel (%p215) target = $region24
        $region23: #{tpu_custom_call.1} parent=11 // pred_region
          %s219 = ssub.s32 256, 256
          %220 = vsyncadd [#allocation9], %s219
          %s221 = sshll.u32 [#allocation8], 4
          %s222 = int_to_ptr.vmem [resolvable:$true] %s221
          %227 = dma.hbm_to_vmem [thread:$0]  %s3, 256, %s222, [#allocation9], 64, 64, 4
        $region24: #{tpu_custom_call.1} parent=11 // pred_fallthru
          _
        // Predicated region
        $region25: #{tpu_custom_call.1} parent=11 // pred_check
          %p228 = pneg %p131
        $region26: #{tpu_custom_call.1} parent=11 // pred_check_branch
          %230 = sbr.rel (%p228) target = $region28
        $region27: #{tpu_custom_call.1} parent=11 // pred_region
          %s232 = ssub.s32 16, 16
          %233 = vsyncadd [#allocation9], %s232
          %s235 = sshll.u32 [#allocation10], 4
          %s236 = int_to_ptr.vmem [resolvable:$true] %s235
          %238 = dma.hbm_to_vmem [thread:$0]  %s4, 16, %s236, [#allocation9]
        $region28: #{tpu_custom_call.1} parent=11 // pred_fallthru
          _
        // Predicated region
        $region29: #{tpu_custom_call.1} parent=11 // pred_check
          %p239 = pneg %p152
        $region30: #{tpu_custom_call.1} parent=11 // pred_check_branch
          %241 = sbr.rel (%p239) target = $region32
        $region31: #{tpu_custom_call.1} parent=11 // pred_region
          %s243 = ssub.s32 1024, 1024
          %244 = vsyncadd [#allocation12], %s243
          %s245 = sshll.u32 [#allocation11], 4
          %s246 = int_to_ptr.vmem [resolvable:$true] %s245
          %251 = dma.hbm_to_vmem [thread:$0]  %s5, 1024, %s246, [#allocation12], 64, 64, 4
        $region32: #{tpu_custom_call.1} parent=11 // pred_fallthru
          _
      $region12: #{tpu_custom_call.1} parent=5 // pred_fallthru
        _
      %p252 = scmp.lt.s32.totalorder %s21, 2
      // Predicated region
      $region33: #{tpu_custom_call.1} parent=5 // pred_check
        %p253 = pneg %p252
      $region34: #{tpu_custom_call.1} parent=5 // pred_check_branch
        %255 = sbr.rel (%p253) target = $region36
      $region35: #{tpu_custom_call.1} parent=5 // pred_region
        // Predicated region
        $region37: #{tpu_custom_call.1} parent=35 // pred_check
          %p256 = pneg %p41
        $region38: #{tpu_custom_call.1} parent=35 // pred_check_branch
          %258 = sbr.rel (%p256) target = $region40
        $region39: #{tpu_custom_call.1} parent=35 // pred_region
          %s259 = sand.u32 %s31, 1
          %s260 = scalar_lea.sflag [#allocation3], %s259
          %s261 = sand.u32 %s31, 1
          %s262 = smul.addr %s261, 8
          %s263 = scalar_lea.vmem [#allocation2], %s262
          %s265 = ssub.s32 128, 128
          %266 = vsyncadd %s260, %s265
          %s267 = smul.addr %s21, 128
          %s268 = scalar_lea.hbm %s0, %s267
          %s270 = sshll.u32 %s263, 4
          %s271 = int_to_ptr.vmem [resolvable:$true] %s270
          %273 = dma.hbm_to_vmem [thread:$0]  %s268, 128, %s271, %s260
        $region40: #{tpu_custom_call.1} parent=35 // pred_fallthru
          _
      $region36: #{tpu_custom_call.1} parent=5 // pred_fallthru
        _
      %p274 = scmp.le.s32.totalorder 1, %s21
      %p275 = scmp.lt.s32.totalorder %s21, 3
      %p276 = pnand %p274, %p275
      %p277 = pneg %p276
      // Predicated region
      $region41: #{tpu_custom_call.1} parent=5 // pred_check
        _
      $region42: #{tpu_custom_call.1} parent=5 // pred_check_branch
        %279 = sbr.rel (%p276) target = $region44
      $region43: #{tpu_custom_call.1} parent=5 // pred_region
        %s280 = ssub.s32 %s21, 1
        %s281 = sand.u32 %s34, 1
        %s282 = scalar_lea.sflag [#allocation3], %s281
        %s283 = sand.u32 %s34, 1
        %s284 = smul.addr %s283, 8
        %s285 = scalar_lea.vmem [#allocation2], %s284
        // Predicated region
        $region45: #{tpu_custom_call.1} parent=43 // pred_check
          %p286 = pneg %p47
        $region46: #{tpu_custom_call.1} parent=43 // pred_check_branch
          %288 = sbr.rel (%p286) target = $region48
        $region47: #{tpu_custom_call.1} parent=43 // pred_region
          %289 = dma.done %s282, 128
        $region48: #{tpu_custom_call.1} parent=43 // pred_fallthru
          _
        // Predicated region
        $region49: #{tpu_custom_call.1} parent=43 // pred_check
          %p290 = pneg %p68
        $region50: #{tpu_custom_call.1} parent=43 // pred_check_branch
          %292 = sbr.rel (%p290) target = $region52
        $region51: #{tpu_custom_call.1} parent=43 // pred_region
          %293 = dma.done [#allocation6], 64
        $region52: #{tpu_custom_call.1} parent=43 // pred_fallthru
          _
        // Predicated region
        $region53: #{tpu_custom_call.1} parent=43 // pred_check
          %p294 = pneg %p89
        $region54: #{tpu_custom_call.1} parent=43 // pred_check_branch
          %296 = sbr.rel (%p294) target = $region56
        $region55: #{tpu_custom_call.1} parent=43 // pred_region
          %297 = dma.done [#allocation6], 128
        $region56: #{tpu_custom_call.1} parent=43 // pred_fallthru
          _
        // Predicated region
        $region57: #{tpu_custom_call.1} parent=43 // pred_check
          %p298 = pneg %p110
        $region58: #{tpu_custom_call.1} parent=43 // pred_check_branch
          %300 = sbr.rel (%p298) target = $region60
        $region59: #{tpu_custom_call.1} parent=43 // pred_region
          %301 = dma.done [#allocation9], 256
        $region60: #{tpu_custom_call.1} parent=43 // pred_fallthru
          _
        // Predicated region
        $region61: #{tpu_custom_call.1} parent=43 // pred_check
          %p302 = pneg %p131
        $region62: #{tpu_custom_call.1} parent=43 // pred_check_branch
          %304 = sbr.rel (%p302) target = $region64
        $region63: #{tpu_custom_call.1} parent=43 // pred_region
          %305 = dma.done [#allocation9], 16
        $region64: #{tpu_custom_call.1} parent=43 // pred_fallthru
          _
        // Predicated region
        $region65: #{tpu_custom_call.1} parent=43 // pred_check
          %p306 = pneg %p152
        $region66: #{tpu_custom_call.1} parent=43 // pred_check_branch
          %308 = sbr.rel (%p306) target = $region68
        $region67: #{tpu_custom_call.1} parent=43 // pred_region
          %309 = dma.done [#allocation12], 1024
        $region68: #{tpu_custom_call.1} parent=43 // pred_fallthru
          _
        %s310 = sand.u32 %s34, 1
        %s311 = scalar_lea.sflag [#allocation3], %s310
        %s312 = sand.u32 %s34, 1
        %s313 = smul.addr %s312, 8
        %s314 = scalar_lea.vmem [#allocation2], %s313
        %p315 = pneg %p47
        %p316 = pneg %p44
        %p317 = pneg %p68
        %p318 = pneg %p65
        %p319 = pneg %p89
        %p320 = pneg %p86
        %p321 = pneg %p110
        %p322 = pneg %p107
        %p323 = pneg %p131
        %p324 = pneg %p128
        %p325 = pneg %p152
        %p326 = pneg %p149
        %p327 = pneg %p178
        %p328 = pneg %p175
        %s329 = sand.u32 %s165, 1
        %s330 = scalar_lea.sflag [#allocation4], %s329
        %s331 = sand.u32 %s165, 1
        %s332 = smul.addr %s331, 8
        %s333 = scalar_lea.vmem [#allocation13], %s332
        %v335 = vld [vmem:[#allocation5] sm:$0xf]
        %v336 = vld [vmem:[#allocation7] sm:$0x1]
        %v337 = vld [vmem:[#allocation7 + $0x1] sm:$0x1]
        %v338 = vld [vmem:[#allocation7 + $0x2] sm:$0x1]
        %v339 = vld [vmem:[#allocation7 + $0x3] sm:$0x1]
        %v340 = vld [vmem:[#allocation7 + $0x4] sm:$0x1]
        %v341 = vld [vmem:[#allocation7 + $0x5] sm:$0x1]
        %v342 = vmul.f32 %v336, %v336
        %v343 = vld [vmem:[%s285] sm:$0xff]
        %v344 = vpack.c.bf16 %v343, %v343
        %vm345 = vcmask 64512
        %v347 = vsel %vm345, %v335, 0
        %vm349 = vcmask 1043456
        %v351 = vsel %vm349, %v344, 0
        %353 = vmatprep.subr.bf16.mxu0 0
        %354 = vmatpush1.bf16.msra.mxu0 %v351
        %355 = vmatprep.subr.bf16.mxu0 0
        %356 = vmatpush1.bf16.msra.mxu0 0
        %357 = vmatprep.subr.bf16.mxu0 0
        %358 = vmatpush1.bf16.msra.mxu0 0
        %359 = vmatprep.subr.bf16.mxu0 0
        %360 = vmatpush1.bf16.msra.mxu0 0
        %361 = vmatprep.subr.bf16.mxu0 0
        %362 = vmatpush1.bf16.msra.mxu0 0
        %363 = vmatprep.subr.bf16.mxu0 0
        %364 = vmatpush1.bf16.msra.mxu0 0
        %365 = vmatprep.subr.bf16.mxu0 0
        %366 = vmatpush1.bf16.msra.mxu0 0
        %367 = vmatprep.subr.bf16.mxu0 0
        %368 = vmatpush1.bf16.msra.mxu0 0
        %369 = vmatprep.subr.bf16.mxu0 0
        %370 = vmatpush1.bf16.msra.mxu0 0
        %371 = vmatprep.subr.bf16.mxu0 0
        %372 = vmatpush1.bf16.msra.mxu0 0
        %373 = vmatprep.subr.bf16.mxu0 0
        %374 = vmatpush1.bf16.msra.mxu0 0
        %375 = vmatprep.subr.bf16.mxu0 0
        %376 = vmatpush1.bf16.msra.mxu0 0
        %377 = vmatprep.subr.bf16.mxu0 0
        %378 = vmatpush1.bf16.msra.mxu0 0
        %379 = vmatprep.subr.bf16.mxu0 0
        %380 = vmatpush1.bf16.msra.mxu0 0
        %381 = vmatprep.subr.bf16.mxu0 0
        %382 = vmatpush1.bf16.msra.mxu0 0
        %383 = vmatprep.subr.bf16.mxu0 0
        %384 = vmatpush1.bf16.msra.mxu0 0
        %385 = vmatprep.mubr.bf16.mxu0 0
        %386 = vmatmul.mubr.bf16.gmra.mrb[0].mxu0 %v347
        %v387 = vpop.f32.mrb[0].mxu0
        %v388 = vadd.f32 0.0, %v387
        %v389 = vpop.f32.mrb[0].mxu0
        %v390 = vpop.f32.mrb[0].mxu0
        %v391 = vpop.f32.mrb[0].mxu0
        %392 = vdwg.mxu0
        %v393 = vsub.f32 %v343, %v388
        %v394 = vlaneseq
        %v395 = vshrl.u32 %v394, 7
        %v396 = vsub.s32 0, %v395
        %v397 = vrot.slane %v342, %v396
        %v398 = vmul.f32 %v397, %v393
        %v399 = vadd.f32 %v388, %v398
        %v400 = vadd.f32 %v399, %v343
        %vm401 = vcmask 261120
        %v402 = vsel %vm401, %v400, 0.0
        %403 = vadd.xlane.f32.xlu0 %v402
        %v404 = vpop.xlane.xlu0 %403
        %v405 = vrcp.pop 32.0
        %v406 = vmul.f32 %v404, %v405
        %v407 = vsub.f32 %v400, %v406
        %v408 = vmul.f32 %v407, %v407
        %v409 = vsel %vm401, %v408, 0.0
        %410 = vadd.xlane.f32.xlu0 %v409
        %v411 = vpop.xlane.xlu0 %410
        %v412 = vmul.f32 %v411, %v405
        %v413 = vadd.f32 %v412, 1e-12
        %v414 = vrsqrt.pop %v413
        %v415 = vmul.f32 %v407, %v414
        %v416 = vlaneseq
        %v417 = vshrl.u32 %v416, 7
        %v418 = vsub.s32 0, %v417
        %v419 = vrot.slane %v337, %v418
        %v420 = vmul.f32 %v415, %v419
        %v421 = vlaneseq
        %v422 = vshrl.u32 %v421, 7
        %v423 = vsub.s32 0, %v422
        %v424 = vrot.slane %v338, %v423
        %v425 = vadd.f32 %v420, %v424
        %v426 = vpack.c.bf16 %v425, %v425
        %v427 = vld [vmem:[#allocation8] sm:$0xf]
        %v428 = vld [vmem:[#allocation8 + $0x4] sm:$0xf]
        %v429 = vld [vmem:[#allocation8 + $0x8] sm:$0xf]
        %v430 = vld [vmem:[#allocation8 + $0xc] sm:$0xf]
        %v431 = vld [vmem:[#allocation10] sm:$0x1]
        %v433 = vlaneseq
        %v434 = vshrl.u32 %v433, 7
        %v435 = vsub.s32 0, %v434
        %v436 = vrot.slane %v431, %v435
        %v442 = vunpack.c.l.b16 %v427
        %v443 = vunpack.c.l.b16 %v428
        %v444 = vunpack.c.l.b16 %v429
        %v445 = vunpack.c.l.b16 %v430
        %v446 = vpack.c.b16 %v443, %v442
        %v447 = vpack.c.b16 %v445, %v444
        %v451 = vsel %vm401, %v426, 0
        %453 = vmatprep.subr.bf16.mxu0 0
        %454 = vmatpush1.bf16.msra.mxu0 %v446
        %455 = vmatprep.subr.bf16.mxu0 0
        %456 = vmatpush1.bf16.msra.mxu0 %v447
        %457 = vmatprep.subr.bf16.mxu0 0
        %458 = vmatpush1.bf16.msra.mxu0 0
        %459 = vmatprep.subr.bf16.mxu0 0
        %460 = vmatpush1.bf16.msra.mxu0 0
        %461 = vmatprep.subr.bf16.mxu0 0
        %462 = vmatpush1.bf16.msra.mxu0 0
        %463 = vmatprep.subr.bf16.mxu0 0
        %464 = vmatpush1.bf16.msra.mxu0 0
        %465 = vmatprep.subr.bf16.mxu0 0
        %466 = vmatpush1.bf16.msra.mxu0 0
        %467 = vmatprep.subr.bf16.mxu0 0
        %468 = vmatpush1.bf16.msra.mxu0 0
        %469 = vmatprep.subr.bf16.mxu0 0
        %470 = vmatpush1.bf16.msra.mxu0 0
        %471 = vmatprep.subr.bf16.mxu0 0
        %472 = vmatpush1.bf16.msra.mxu0 0
        %473 = vmatprep.subr.bf16.mxu0 0
        %474 = vmatpush1.bf16.msra.mxu0 0
        %475 = vmatprep.subr.bf16.mxu0 0
        %476 = vmatpush1.bf16.msra.mxu0 0
        %477 = vmatprep.subr.bf16.mxu0 0
        %478 = vmatpush1.bf16.msra.mxu0 0
        %479 = vmatprep.subr.bf16.mxu0 0
        %480 = vmatpush1.bf16.msra.mxu0 0
        %481 = vmatprep.subr.bf16.mxu0 0
        %482 = vmatpush1.bf16.msra.mxu0 0
        %483 = vmatprep.subr.bf16.mxu0 0
        %484 = vmatpush1.bf16.msra.mxu0 0
        %485 = vmatprep.mubr.bf16.mxu0 0
        %486 = vmatmul.mubr.bf16.gmra.mrb[0].mxu0 %v451
        %v487 = vpop.f32.mrb[0].mxu0
        %v488 = vadd.f32 %v436, %v487
        %v489 = vpop.f32.mrb[0].mxu0
        %v490 = vpop.f32.mrb[0].mxu0
        %v491 = vpop.f32.mrb[0].mxu0
        %492 = vdwg.mxu0
        %v493 = vmul.f32 %v488, 0.5
        %v494 = vmul.f32 %v488, 0.70710677
        %v495 = verf.f32.pop %v494
        %v496 = vadd.f32 %v495, 1.0
        %v497 = vmul.f32 %v493, %v496
        %v498 = vpack.c.bf16 %v497, %v497
        %v499 = vld [vmem:[#allocation11] sm:$0xf]
        %v500 = vld [vmem:[#allocation11 + $0x4] sm:$0xf]
        %v501 = vld [vmem:[#allocation11 + $0x8] sm:$0xf]
        %v502 = vld [vmem:[#allocation11 + $0xc] sm:$0xf]
        %v503 = vld [vmem:[#allocation11 + $0x10] sm:$0xf]
        %v504 = vld [vmem:[#allocation11 + $0x14] sm:$0xf]
        %v505 = vld [vmem:[#allocation11 + $0x18] sm:$0xf]
        %v506 = vld [vmem:[#allocation11 + $0x1c] sm:$0xf]
        %v507 = vld [vmem:[#allocation11 + $0x20] sm:$0xf]
        %v508 = vld [vmem:[#allocation11 + $0x24] sm:$0xf]
        %v509 = vld [vmem:[#allocation11 + $0x28] sm:$0xf]
        %v510 = vld [vmem:[#allocation11 + $0x2c] sm:$0xf]
        %v511 = vld [vmem:[#allocation11 + $0x30] sm:$0xf]
        %v512 = vld [vmem:[#allocation11 + $0x34] sm:$0xf]
        %v513 = vld [vmem:[#allocation11 + $0x38] sm:$0xf]
        %v514 = vld [vmem:[#allocation11 + $0x3c] sm:$0xf]
        %v515 = vlaneseq
        %v516 = vshrl.u32 %v515, 7
        %v517 = vsub.s32 0, %v516
        %v518 = vrot.slane %v339, %v517
        %v535 = vunpack.c.l.b16 %v499
        %v536 = vunpack.c.l.b16 %v500
        %v537 = vunpack.c.l.b16 %v501
        %v538 = vunpack.c.l.b16 %v502
        %v539 = vunpack.c.l.b16 %v503
        %v540 = vunpack.c.l.b16 %v504
        %v541 = vunpack.c.l.b16 %v505
        %v542 = vunpack.c.l.b16 %v506
        %v543 = vunpack.c.l.b16 %v507
        %v544 = vunpack.c.l.b16 %v508
        %v545 = vunpack.c.l.b16 %v509
        %v546 = vunpack.c.l.b16 %v510
        %v547 = vunpack.c.l.b16 %v511
        %v548 = vunpack.c.l.b16 %v512
        %v549 = vunpack.c.l.b16 %v513
        %v550 = vunpack.c.l.b16 %v514
        %v551 = vpack.c.b16 %v536, %v535
        %v552 = vpack.c.b16 %v538, %v537
        %v553 = vpack.c.b16 %v540, %v539
        %v554 = vpack.c.b16 %v542, %v541
        %v555 = vpack.c.b16 %v544, %v543
        %v556 = vpack.c.b16 %v546, %v545
        %v557 = vpack.c.b16 %v548, %v547
        %v558 = vpack.c.b16 %v550, %v549
        %567 = vmatprep.subr.bf16.mxu0 0
        %568 = vmatpush1.bf16.msra.mxu0 %v551
        %569 = vmatprep.subr.bf16.mxu0 0
        %570 = vmatpush1.bf16.msra.mxu0 %v552
        %571 = vmatprep.subr.bf16.mxu0 0
        %572 = vmatpush1.bf16.msra.mxu0 %v553
        %573 = vmatprep.subr.bf16.mxu0 0
        %574 = vmatpush1.bf16.msra.mxu0 %v554
        %575 = vmatprep.subr.bf16.mxu0 0
        %576 = vmatpush1.bf16.msra.mxu0 %v555
        %577 = vmatprep.subr.bf16.mxu0 0
        %578 = vmatpush1.bf16.msra.mxu0 %v556
        %579 = vmatprep.subr.bf16.mxu0 0
        %580 = vmatpush1.bf16.msra.mxu0 %v557
        %581 = vmatprep.subr.bf16.mxu0 0
        %582 = vmatpush1.bf16.msra.mxu0 %v558
        %583 = vmatprep.subr.bf16.mxu0 0
        %584 = vmatpush1.bf16.msra.mxu0 0
        %585 = vmatprep.subr.bf16.mxu0 0
        %586 = vmatpush1.bf16.msra.mxu0 0
        %587 = vmatprep.subr.bf16.mxu0 0
        %588 = vmatpush1.bf16.msra.mxu0 0
        %589 = vmatprep.subr.bf16.mxu0 0
        %590 = vmatpush1.bf16.msra.mxu0 0
        %591 = vmatprep.subr.bf16.mxu0 0
        %592 = vmatpush1.bf16.msra.mxu0 0
        %593 = vmatprep.subr.bf16.mxu0 0
        %594 = vmatpush1.bf16.msra.mxu0 0
        %595 = vmatprep.subr.bf16.mxu0 0
        %596 = vmatpush1.bf16.msra.mxu0 0
        %597 = vmatprep.subr.bf16.mxu0 0
        %598 = vmatpush1.bf16.msra.mxu0 0
        %599 = vmatprep.mubr.bf16.mxu0 0
        %600 = vmatmul.mubr.bf16.gmra.mrb[0].mxu0 %v498
        %v601 = vpop.f32.mrb[0].mxu0
        %v602 = vadd.f32 %v518, %v601
        %v603 = vpop.f32.mrb[0].mxu0
        %v604 = vpop.f32.mrb[0].mxu0
        %v605 = vpop.f32.mrb[0].mxu0
        %606 = vdwg.mxu0
        %v607 = vadd.f32 %v602, %v425
        %v608 = vsel %vm401, %v607, 0.0
        %609 = vadd.xlane.f32.xlu0 %v608
        %v610 = vpop.xlane.xlu0 %609
        %v611 = vmul.f32 %v610, %v405
        %v612 = vsub.f32 %v607, %v611
        %v613 = vmul.f32 %v612, %v612
        %v614 = vsel %vm401, %v613, 0.0
        %615 = vadd.xlane.f32.xlu0 %v614
        %v616 = vpop.xlane.xlu0 %615
        %v617 = vmul.f32 %v616, %v405
        %v618 = vadd.f32 %v617, 1e-12
        %v619 = vrsqrt.pop %v618
        %v620 = vmul.f32 %v612, %v619
        %v621 = vlaneseq
        %v622 = vshrl.u32 %v621, 7
        %v623 = vsub.s32 0, %v622
        %v624 = vrot.slane %v340, %v623
        %v625 = vmul.f32 %v620, %v624
        %v626 = vlaneseq
        %v627 = vshrl.u32 %v626, 7
        %v628 = vsub.s32 0, %v627
        %v629 = vrot.slane %v341, %v628
        %v630 = vadd.f32 %v625, %v629
        %v631 = vpack.c.bf16 %v630, %v630
        %v633 = vsel %vm349, %v631, 0
        %635 = vmatprep.subr.bf16.mxu0 0
        %636 = vmatpush1.bf16.msra.mxu0 %v633
        %637 = vmatprep.subr.bf16.mxu0 0
        %638 = vmatpush1.bf16.msra.mxu0 0
        %639 = vmatprep.subr.bf16.mxu0 0
        %640 = vmatpush1.bf16.msra.mxu0 0
        %641 = vmatprep.subr.bf16.mxu0 0
        %642 = vmatpush1.bf16.msra.mxu0 0
        %643 = vmatprep.subr.bf16.mxu0 0
        %644 = vmatpush1.bf16.msra.mxu0 0
        %645 = vmatprep.subr.bf16.mxu0 0
        %646 = vmatpush1.bf16.msra.mxu0 0
        %647 = vmatprep.subr.bf16.mxu0 0
        %648 = vmatpush1.bf16.msra.mxu0 0
        %649 = vmatprep.subr.bf16.mxu0 0
        %650 = vmatpush1.bf16.msra.mxu0 0
        %651 = vmatprep.subr.bf16.mxu0 0
        %652 = vmatpush1.bf16.msra.mxu0 0
        %653 = vmatprep.subr.bf16.mxu0 0
        %654 = vmatpush1.bf16.msra.mxu0 0
        %655 = vmatprep.subr.bf16.mxu0 0
        %656 = vmatpush1.bf16.msra.mxu0 0
        %657 = vmatprep.subr.bf16.mxu0 0
        %658 = vmatpush1.bf16.msra.mxu0 0
        %659 = vmatprep.subr.bf16.mxu0 0
        %660 = vmatpush1.bf16.msra.mxu0 0
        %661 = vmatprep.subr.bf16.mxu0 0
        %662 = vmatpush1.bf16.msra.mxu0 0
        %663 = vmatprep.subr.bf16.mxu0 0
        %664 = vmatpush1.bf16.msra.mxu0 0
        %665 = vmatprep.subr.bf16.mxu0 0
        %666 = vmatpush1.bf16.msra.mxu0 0
        %667 = vmatprep.mubr.bf16.mxu0 0
        %668 = vmatmul.mubr.bf16.gmra.mrb[0].mxu0 %v347
        %v669 = vpop.f32.mrb[0].mxu0
        %v670 = vadd.f32 0.0, %v669
        %v671 = vpop.f32.mrb[0].mxu0
        %v672 = vpop.f32.mrb[0].mxu0
        %v673 = vpop.f32.mrb[0].mxu0
        %674 = vdwg.mxu0
        %v675 = vsub.f32 %v630, %v670
        %v676 = vmul.f32 %v397, %v675
        %v677 = vadd.f32 %v670, %v676
        %v678 = vadd.f32 %v677, %v630
        %v679 = vsel %vm401, %v678, 0.0
        %680 = vadd.xlane.f32.xlu0 %v679
        %v681 = vpop.xlane.xlu0 %680
        %v682 = vmul.f32 %v681, %v405
        %v683 = vsub.f32 %v678, %v682
        %v684 = vmul.f32 %v683, %v683
        %v685 = vsel %vm401, %v684, 0.0
        %686 = vadd.xlane.f32.xlu0 %v685
        %v687 = vpop.xlane.xlu0 %686
        %v688 = vmul.f32 %v687, %v405
        %v689 = vadd.f32 %v688, 1e-12
        %v690 = vrsqrt.pop %v689
        %v691 = vmul.f32 %v683, %v690
        %v692 = vmul.f32 %v691, %v419
        %v693 = vadd.f32 %v692, %v424
        %v694 = vpack.c.bf16 %v693, %v693
        %v696 = vsel %vm401, %v694, 0
        %698 = vmatprep.subr.bf16.mxu0 0
        %699 = vmatpush1.bf16.msra.mxu0 %v446
        %700 = vmatprep.subr.bf16.mxu0 0
        %701 = vmatpush1.bf16.msra.mxu0 %v447
        %702 = vmatprep.subr.bf16.mxu0 0
        %703 = vmatpush1.bf16.msra.mxu0 0
        %704 = vmatprep.subr.bf16.mxu0 0
        %705 = vmatpush1.bf16.msra.mxu0 0
        %706 = vmatprep.subr.bf16.mxu0 0
        %707 = vmatpush1.bf16.msra.mxu0 0
        %708 = vmatprep.subr.bf16.mxu0 0
        %709 = vmatpush1.bf16.msra.mxu0 0
        %710 = vmatprep.subr.bf16.mxu0 0
        %711 = vmatpush1.bf16.msra.mxu0 0
        %712 = vmatprep.subr.bf16.mxu0 0
        %713 = vmatpush1.bf16.msra.mxu0 0
        %714 = vmatprep.subr.bf16.mxu0 0
        %715 = vmatpush1.bf16.msra.mxu0 0
        %716 = vmatprep.subr.bf16.mxu0 0
        %717 = vmatpush1.bf16.msra.mxu0 0
        %718 = vmatprep.subr.bf16.mxu0 0
        %719 = vmatpush1.bf16.msra.mxu0 0
        %720 = vmatprep.subr.bf16.mxu0 0
        %721 = vmatpush1.bf16.msra.mxu0 0
        %722 = vmatprep.subr.bf16.mxu0 0
        %723 = vmatpush1.bf16.msra.mxu0 0
        %724 = vmatprep.subr.bf16.mxu0 0
        %725 = vmatpush1.bf16.msra.mxu0 0
        %726 = vmatprep.subr.bf16.mxu0 0
        %727 = vmatpush1.bf16.msra.mxu0 0
        %728 = vmatprep.subr.bf16.mxu0 0
        %729 = vmatpush1.bf16.msra.mxu0 0
        %730 = vmatprep.mubr.bf16.mxu0 0
        %731 = vmatmul.mubr.bf16.gmra.mrb[0].mxu0 %v696
        %v732 = vpop.f32.mrb[0].mxu0
        %v733 = vadd.f32 %v436, %v732
        %v734 = vpop.f32.mrb[0].mxu0
        %v735 = vpop.f32.mrb[0].mxu0
        %v736 = vpop.f32.mrb[0].mxu0
        %737 = vdwg.mxu0
        %v738 = vmul.f32 %v733, 0.5
        %v739 = vmul.f32 %v733, 0.70710677
        %v740 = verf.f32.pop %v739
        %v741 = vadd.f32 %v740, 1.0
        %v742 = vmul.f32 %v738, %v741
        %v743 = vpack.c.bf16 %v742, %v742
        %744 = vmatprep.subr.bf16.mxu0 0
        %745 = vmatpush1.bf16.msra.mxu0 %v551
        %746 = vmatprep.subr.bf16.mxu0 0
        %747 = vmatpush1.bf16.msra.mxu0 %v552
        %748 = vmatprep.subr.bf16.mxu0 0
        %749 = vmatpush1.bf16.msra.mxu0 %v553
        %750 = vmatprep.subr.bf16.mxu0 0
        %751 = vmatpush1.bf16.msra.mxu0 %v554
        %752 = vmatprep.subr.bf16.mxu0 0
        %753 = vmatpush1.bf16.msra.mxu0 %v555
        %754 = vmatprep.subr.bf16.mxu0 0
        %755 = vmatpush1.bf16.msra.mxu0 %v556
        %756 = vmatprep.subr.bf16.mxu0 0
        %757 = vmatpush1.bf16.msra.mxu0 %v557
        %758 = vmatprep.subr.bf16.mxu0 0
        %759 = vmatpush1.bf16.msra.mxu0 %v558
        %760 = vmatprep.subr.bf16.mxu0 0
        %761 = vmatpush1.bf16.msra.mxu0 0
        %762 = vmatprep.subr.bf16.mxu0 0
        %763 = vmatpush1.bf16.msra.mxu0 0
        %764 = vmatprep.subr.bf16.mxu0 0
        %765 = vmatpush1.bf16.msra.mxu0 0
        %766 = vmatprep.subr.bf16.mxu0 0
        %767 = vmatpush1.bf16.msra.mxu0 0
        %768 = vmatprep.subr.bf16.mxu0 0
        %769 = vmatpush1.bf16.msra.mxu0 0
        %770 = vmatprep.subr.bf16.mxu0 0
        %771 = vmatpush1.bf16.msra.mxu0 0
        %772 = vmatprep.subr.bf16.mxu0 0
        %773 = vmatpush1.bf16.msra.mxu0 0
        %774 = vmatprep.subr.bf16.mxu0 0
        %775 = vmatpush1.bf16.msra.mxu0 0
        %776 = vmatprep.mubr.bf16.mxu0 0
        %777 = vmatmul.mubr.bf16.gmra.mrb[0].mxu0 %v743
        %v778 = vpop.f32.mrb[0].mxu0
        %v779 = vadd.f32 %v518, %v778
        %v780 = vpop.f32.mrb[0].mxu0
        %v781 = vpop.f32.mrb[0].mxu0
        %v782 = vpop.f32.mrb[0].mxu0
        %783 = vdwg.mxu0
        %v784 = vadd.f32 %v779, %v693
        %v785 = vsel %vm401, %v784, 0.0
        %786 = vadd.xlane.f32.xlu0 %v785
        %v787 = vpop.xlane.xlu0 %786
        %v788 = vmul.f32 %v787, %v405
        %v789 = vsub.f32 %v784, %v788
        %v790 = vmul.f32 %v789, %v789
        %v791 = vsel %vm401, %v790, 0.0
        %792 = vadd.xlane.f32.xlu0 %v791
        %v793 = vpop.xlane.xlu0 %792
        %v794 = vmul.f32 %v793, %v405
        %v795 = vadd.f32 %v794, 1e-12
        %v796 = vrsqrt.pop %v795
        %v797 = vmul.f32 %v789, %v796
        %v798 = vmul.f32 %v797, %v624
        %v799 = vadd.f32 %v798, %v629
        %800 = vst.msk [vmem:[%s333] sm:$0xff] %vm401, %v799
        %s801 = sand.u32 %s165, 1
        %s802 = scalar_lea.sflag [#allocation4], %s801
        %s803 = sand.u32 %s165, 1
        %s804 = smul.addr %s803, 8
        %s805 = scalar_lea.vmem [#allocation13], %s804
        // Predicated region
        $region69: #{tpu_custom_call.1} parent=43 // pred_check
          %p806 = pneg %p175
        $region70: #{tpu_custom_call.1} parent=43 // pred_check_branch
          %808 = sbr.rel (%p806) target = $region72
        $region71: #{tpu_custom_call.1} parent=43 // pred_region
          %s810 = ssub.s32 128, 128
          %811 = vsyncadd %s802, %s810
          %s812 = smul.addr %s26, 128
          %s813 = scalar_lea.hbm %s6, %s812
          %s815 = sshll.u32 %s805, 4
          %s816 = int_to_ptr.vmem [resolvable:$true] %s815
          %818 = dma.vmem_to_hbm [thread:$0]  %s816, 128, %s813, %s802
        $region72: #{tpu_custom_call.1} parent=43 // pred_fallthru
          _
      $region44: #{tpu_custom_call.1} parent=5 // pred_fallthru
        _
      %p819 = scmp.le.s32.totalorder 2, %s21
      // Predicated region
      $region73: #{tpu_custom_call.1} parent=5 // pred_check
        %p820 = pneg %p819
      $region74: #{tpu_custom_call.1} parent=5 // pred_check_branch
        %822 = sbr.rel (%p820) target = $region76
      $region75: #{tpu_custom_call.1} parent=5 // pred_region
        %s823 = ssub.s32 %s21, 2
        // Predicated region
        $region77: #{tpu_custom_call.1} parent=75 // pred_check
          %p824 = pneg %p181
        $region78: #{tpu_custom_call.1} parent=75 // pred_check_branch
          %826 = sbr.rel (%p824) target = $region80
        $region79: #{tpu_custom_call.1} parent=75 // pred_region
          %s827 = sand.u32 %s166, 1
          %s828 = scalar_lea.sflag [#allocation4], %s827
          %s829 = sand.u32 %s166, 1
          %s830 = smul.addr %s829, 8
          %s831 = scalar_lea.vmem [#allocation13], %s830
          %832 = dma.done %s828, 128
        $region80: #{tpu_custom_call.1} parent=75 // pred_fallthru
          _
      $region76: #{tpu_custom_call.1} parent=5 // pred_fallthru
        _
    $region6: #{tpu_custom_call.1} parent=1 // loop_footer
      %s25 = sadd.s32 1, %s21
    $region7: #{tpu_custom_call.1} parent=1 // loop_footer_branch
      %20 = sbr.rel target = $region3
    $region8: #{tpu_custom_call.1} parent=1 // loop_exit
      _
    %833 = vsyncpa [#allocation3], 1
    %s834 = scalar_lea.sflag [#allocation3], 1
    %835 = vsyncpa %s834, 1
    %836 = vsyncpa [#allocation6], 1
    %837 = vsyncpa [#allocation9], 1
    %838 = vsyncpa [#allocation12], 1
    %839 = vsyncpa [#allocation4], 1
    %s840 = scalar_lea.sflag [#allocation4], 1
    %841 = vsyncpa %s840, 1

</llo_original>
